<compile_context>
chip_gen: v7x
topology: tpu7x:2x2x1
jax: 0.10.0
libtpu: 0.0.40
codegen_flags: <defaults>
</compile_context>

<pallas_src>
import math
import jax
import jax.numpy as jnp
from jax.experimental import pallas as pl
from jax.experimental.pallas import tpu as pltpu


def _round_up(x, m):
    return ((x + m - 1) // m) * m


# ----------------------------------------------------------------------------
# Pallas kernel:  out[r, 0] = sum_f Xflat[r, f] * W[f, 0] + bias_total
#   x_ref: (tb, C, F)   w_ref: (F, 1)   b_ref: SMEM (1, 1) f32   o_ref: (tb*C, 1)
# The K=F contraction runs on the MXU (N=1 matvec), accumulated in float32.
# ----------------------------------------------------------------------------
def _tied_linear_kernel(x_ref, w_ref, b_ref, o_ref):
    tb, c, f = x_ref.shape
    x2 = x_ref[...].reshape(tb * c, f)                       # leading-dim merge
    acc = jnp.dot(x2, w_ref[...],
                  preferred_element_type=jnp.float32,
                  precision=jax.lax.Precision.HIGHEST)       # (tb*c, 1) f32
    o_ref[...] = (acc + b_ref[0, 0]).astype(o_ref.dtype)


# ----------------------------------------------------------------------------
# Wrapper: parameter glue + pallas_call + scatter epilogue
# ----------------------------------------------------------------------------
def tied_linear_forward(X, index, mask, weight_list, bias_list, env, output_dim,
                        *, batch_tile=2048):
    """Reproduces TiedLinear.forward(X, index, mask).

    Tiling: X tile bytes = tb * output_dim * in_features * itemsize, double
    buffered.  tb is capped so the tile stays <= ~16 MiB (v7x-safe), rounded to
    a multiple of 8, and kept small enough that the grid has >= 2 steps so the
    "parallel" batch axis can shard across v7x's 2 TensorCores.
    """
    batch, out_dim, in_features_x = X.shape
    assert out_dim == output_dim

    # ---- concat_weights(): W is shared across classes -> keep as one row ----
    W = jnp.concatenate(list(weight_list), axis=-1)            # (1, in_features)
    if env["weight_norm"]:
        W = W / jnp.linalg.norm(W)                             # .div(W.norm(p=2))
    in_features = W.shape[-1]
    assert in_features == in_features_x
    W_col = W.reshape(in_features, 1).astype(X.dtype)          # MXU RHS (K, 1)

    # ---- bias: in the original module B (rows identical across classes) is
    # added elementwise before the feature sum, so every output element gets
    # the single scalar sum of all bias entries.  Fused into the kernel. ----
    if bias_list is not None:
        bias_total = jnp.sum(jnp.concatenate(list(bias_list), axis=-1))
    else:
        bias_total = jnp.zeros((), jnp.float32)
    bias_arr = jnp.reshape(bias_total.astype(jnp.float32), (1, 1))

    # Accumulate / run the epilogue in at least f32 (robust if X is bf16).
    out_dtype = jnp.promote_types(X.dtype, jnp.float32)

    # ---- tiling ----
    itemsize = jnp.dtype(X.dtype).itemsize
    out_itemsize = jnp.dtype(out_dtype).itemsize
    row_bytes = output_dim * in_features * itemsize
    # Cap X tile at ~16 MiB (32 MiB double buffered): fits v7x 64 MiB/TC with
    # headroom, trivially fine on v5e/v6e (128 MiB).
    vmem_cap_rows = max(8, (((16 << 20) // max(row_bytes, 1)) // 8) * 8)
    # Keep >= 2 balanced grid steps for megacore sharding on v7x.
    tb = min(batch_tile, vmem_cap_rows, _round_up(pl.cdiv(batch, 2), 8))
    if tb >= batch:
        tb = batch                                   # single full-extent block
    else:
        tb = min(_round_up(tb, 8), batch)            # sublane-aligned tiles
    grid = (pl.cdiv(batch, tb),)                     # ragged batch -> clipped tile

    x_tile_bytes = tb * output_dim * in_features * itemsize
    o_tile_bytes = tb * output_dim * out_itemsize
    w_bytes = in_features * itemsize
    vmem_limit = int(2 * (x_tile_bytes + o_tile_bytes) + 2 * w_bytes + (4 << 20))

    cost = pl.CostEstimate(
        flops=2 * batch * output_dim * in_features,
        transcendentals=0,
        bytes_accessed=X.nbytes + batch * output_dim * out_itemsize + W_col.nbytes,
    )

    x_spec = pl.BlockSpec((tb, output_dim, in_features), lambda i: (i, 0, 0))
    w_spec = pl.BlockSpec((in_features, 1), lambda i: (0, 0))    # one DMA, reused
    b_spec = pl.BlockSpec(memory_space=pltpu.MemorySpace.SMEM)   # scalar bias
    o_spec = pl.BlockSpec((tb * output_dim, 1), lambda i: (i, 0))

    out_flat = pl.pallas_call(
        _tied_linear_kernel,
        out_shape=jax.ShapeDtypeStruct((batch * output_dim, 1), out_dtype),
        grid_spec=pltpu.PrefetchScalarGridSpec(
            num_scalar_prefetch=0,
            grid=grid,
            in_specs=[x_spec, w_spec, b_spec],
            out_specs=o_spec,
        ),
        compiler_params=pltpu.CompilerParams(
            dimension_semantics=("parallel",),
            vmem_limit_bytes=vmem_limit,
        ),
        cost_estimate=cost,
    )(X, W_col, bias_arr)

    # (batch*C, 1) -> (batch, C): free row-major bitcast in XLA.
    out = out_flat.reshape(batch, output_dim)

    # ---- epilogue: output.index_add_(0, index, mask) ----
    # TODO(synk): data-dependent scatter-add kept as JAX glue; could be fused
    # via scalar-prefetched indices if it ever shows up in profiles.
    out = out.at[index].add(mask.astype(out.dtype))
    return out


# ----------------------------------------------------------------------------
# Deterministic parameter construction (mirrors TiedLinear.__init__)
# ----------------------------------------------------------------------------
def build_tied_linear_params(key, feat_info, bias=False):
    """feat_info: list of (learnable: bool, size: int, init_weight: float)."""
    weight_list, bias_list = [], ([] if bias else None)
    for learnable, feat_size, init_weight in feat_info:
        key, kw, kb = jax.random.split(key, 3)
        if learnable:
            stdv = 1.0 / math.sqrt(1)   # tensor.size(0) == 1 for (1, feat_size)
            w = jax.random.uniform(kw, (1, feat_size), jnp.float32, -stdv, stdv)
        else:
            w = init_weight * jnp.ones((1, feat_size), jnp.float32)
        weight_list.append(w)
        if bias:
            if learnable:
                stdv = 1.0 / math.sqrt(1)
                b = jax.random.uniform(kb, (1, feat_size), jnp.float32, -stdv, stdv)
            else:
                b = jnp.zeros((1, feat_size), jnp.float32)
            bias_list.append(b)
    return weight_list, bias_list


# ----------------------------------------------------------------------------
# Pure-JAX reference (mirrors the PyTorch forward exactly)
# ----------------------------------------------------------------------------
def tied_linear_reference(X, index, mask, weight_list, bias_list, env, output_dim):
    W = jnp.concatenate(list(weight_list), axis=-1)
    if env["weight_norm"]:
        W = W / jnp.linalg.norm(W)
    W = jnp.broadcast_to(W, (output_dim, W.shape[-1]))
    out = X * W[None]
    if bias_list is not None:
        B = jnp.concatenate(
            [jnp.broadcast_to(b, (output_dim, b.shape[-1])) for b in bias_list], -1)
        out = out + B[None]
    out = out.sum(2)
    out = out.at[index].add(mask)
    return out


if __name__ == "__main__":
    key = jax.random.PRNGKey(0)

    output_dim = 16                       # number of classes
    feat_info = [                         # (learnable, size, init_weight)
        (True, 32, 1.0),
        (False, 64, 1.0),
        (True, 32, 1.0),
    ]
    in_features = sum(f[1] for f in feat_info)     # 128
    env = {"weight_norm": True}

    kp, kx, km = jax.random.split(key, 3)
    wl_bias, bl_bias = build_tied_linear_params(kp, feat_info, bias=True)
    wl_nobias, _ = build_tied_linear_params(kp, feat_info, bias=False)

    ok = True
    # (batch, batch_tile or None for default, use_bias):
    #  * divisible batch, 2 grid steps
    #  * non-divisible batch -> partial (clipped) last tile
    #  * default tile-sizing path, no bias
    configs = [(32, 16, True), (24, 16, True), (40, None, False)]
    for batch, tile, use_bias in configs:
        kx1 = jax.random.fold_in(kx, batch)
        km1 = jax.random.fold_in(km, batch)
        X = jax.random.normal(kx1, (batch, output_dim, in_features), jnp.float32)
        index = jnp.arange(batch, dtype=jnp.int32)
        mask = jnp.where(
            jax.random.uniform(km1, (batch, output_dim)) < 0.3, -1e6, 0.0
        ).astype(jnp.float32)

        weight_list = wl_bias if use_bias else wl_nobias
        bias_list = bl_bias if use_bias else None
        kwargs = {} if tile is None else {"batch_tile": tile}

        out = tied_linear_forward(X, index, mask, weight_list, bias_list, env,
                                  output_dim, **kwargs)
        out = jax.block_until_ready(out)
        ref = tied_linear_reference(X, index, mask, weight_list, bias_list, env,
                                    output_dim)
        ok &= out.shape == (batch, output_dim)
        ok &= bool(jnp.allclose(out, ref, atol=1e-2, rtol=1e-4))

    assert ok, "mismatch vs reference"
    print("KERNEL_OK")
</pallas_src>

<mosaic_0001>
module attributes {stable_mosaic.version = 11 : i64} {
  func.func @_tied_linear_kernel(%arg0: i32, %arg1: memref<16x16x128xf32, #tpu.memory_space<vmem>>, %arg2: memref<128x1xf32, #tpu.memory_space<vmem>>, %arg3: memref<1x1xf32, #tpu.memory_space<smem>>, %arg4: memref<256x1xf32, #tpu.memory_space<vmem>>) attributes {dimension_semantics = [#tpu.dimension_semantics<parallel>], iteration_bounds = array<i64: 2>, scalar_prefetch = 0 : i64, scratch_operands = 0 : i64, tpu.core_type = #tpu.core_type<tc>, window_params = [{transform_indices = @transform_0, window_bounds = array<i64: 16, 16, 128>}, {pipeline_mode = #tpu.pipeline_mode<synchronous>, transform_indices = @transform_1, window_bounds = array<i64: 128, 1>}, {transform_indices = @transform_2, window_bounds = array<i64: 1, 1>}, {transform_indices = @transform_3, window_bounds = array<i64: 256, 1>}]} {
    %c0 = arith.constant 0 : index
    %c0_0 = arith.constant 0 : index
    %c0_1 = arith.constant 0 : index
    %0 = vector.load %arg1[%c0, %c0_0, %c0_1] : memref<16x16x128xf32, #tpu.memory_space<vmem>>, vector<16x16x128xf32>
    %1 = vector.shape_cast %0 : vector<16x16x128xf32> to vector<256x128xf32>
    %c0_2 = arith.constant 0 : index
    %c0_3 = arith.constant 0 : index
    %2 = vector.load %arg2[%c0_2, %c0_3] : memref<128x1xf32, #tpu.memory_space<vmem>>, vector<128x1xf32>
    %cst = arith.constant dense<0.000000e+00> : vector<256x1xf32>
    %3 = tpu.matmul %1, %2, %cst {dimension_numbers = #tpu.dot_dimension_numbers<[1], [0], [0], [1], [0, 0, 1, 1], [], []>, precision = #tpu.contract_precision<fp32>} : vector<256x128xf32>, vector<128x1xf32>, vector<256x1xf32> -> vector<256x1xf32>
    %c0_4 = arith.constant 0 : index
    %c0_5 = arith.constant 0 : index
    %4 = memref.load %arg3[%c0_4, %c0_5] : memref<1x1xf32, #tpu.memory_space<smem>>
    %5 = vector.broadcast %4 : f32 to vector<256x1xf32>
    %6 = arith.addf %3, %5 : vector<256x1xf32>
    %c0_6 = arith.constant 0 : index
    %c0_7 = arith.constant 0 : index
    %7 = vector.load %arg4[%c0_6, %c0_7] : memref<256x1xf32, #tpu.memory_space<vmem>>, vector<256x1xf32>
    tpu.vector_store %arg4[%c0_6, %c0_7], %6 {strides = array<i32>} : memref<256x1xf32, #tpu.memory_space<vmem>>, vector<256x1xf32>,
    return
  }
  func.func @transform_0(%arg0: i32) -> (i32, i32, i32) {
    %c0_i32 = arith.constant 0 : i32
    %c0_i32_0 = arith.constant 0 : i32
    %c0_i32_1 = arith.constant 0 : i32
    return %arg0, %c0_i32, %c0_i32_0 : i32, i32, i32
  }
  func.func @transform_1(%arg0: i32) -> (i32, i32) {
    %c0_i32 = arith.constant 0 : i32
    %c0_i32_0 = arith.constant 0 : i32
    %c0_i32_1 = arith.constant 0 : i32
    return %c0_i32, %c0_i32_0 : i32, i32
  }
  func.func @transform_2(%arg0: i32) -> (i32, i32) {
    %c0_i32 = arith.constant 0 : i32
    %c0_i32_0 = arith.constant 0 : i32
    %c0_i32_1 = arith.constant 0 : i32
    return %c0_i32, %c0_i32_0 : i32, i32
  }
  func.func @transform_3(%arg0: i32) -> (i32, i32) {
    %c0_i32 = arith.constant 0 : i32
    %c0_i32_0 = arith.constant 0 : i32
    return %arg0, %c0_i32 : i32, i32
  }
}

</mosaic_0001>

<llo_original>
// kernel: tpu_custom_call.1
$region0: #{tpu_custom_call.1}
  #allocation0 [shape = 'u32[]', space=smem, size = 0x4, offset = 0x4, fixed_abs, tag = 'smem constant byte address 0x4 - core index']
  #allocation1 [shape = 'u32[144,128]{1,0:T(1,128)}', space=vmem, size = 0x12000, scoped, tag = 'internal scratch']
  #allocation2 [shape = 'f32[1,1]{1,0:T(1,128)S(6)}', space=smem, size = 0x200, scoped, tag = 'scoped memory for tpu_custom_call.1']
  %s0 = inlined_call_operand.hbm [shape: f32[32,16,128], index: 0, kind: input, shape index: {}]
  %s1 = inlined_call_operand.vmem [shape: f32[128,1], index: 1, kind: input, shape index: {}]
  %s2 = inlined_call_operand.<no memory space> [shape: f32[1,1], index: 2, kind: input, shape index: {}]
  %s3 = inlined_call_operand.vmem [shape: f32[512,1], index: 3, kind: output, shape index: {}]
  %s4 = sld [smem:[#allocation0]]
  $region49: #{tpu_custom_call.1} parent=0
    _
  %s6 = ssub.s32 1, %s4
  %s7 = scalar_select 0, %s6, %s4
  %8 = sst [smem:[#allocation2]] %s2
  $region1: #{tpu_custom_call.1} parent=0
    #allocation3 [shape = 'u8[262144]{0}', space=vmem, size = 0x40000, scoped, tag = 'input window, operand 0']
    #allocation4 [shape = 's32[2]{0}', space=sflag, size = 0x8, scoped, tag = 'scoped memory for tpu_custom_call.1']
    %9 = vsyncpa [#allocation4], 0
    %s10 = scalar_lea.sflag [#allocation4], 1
    %11 = vsyncpa %s10, 0
    loop: start=0, step=1, limit=4
    $region2: #{tpu_custom_call.1} parent=1 // loop_pre_header
      _
    $region3: #{tpu_custom_call.1} parent=1 // loop_header
      %s13 = sphi 0, %s17
      %p14 = scmp.ge.s32.totalorder %s13, 4
      %s23 = sphi 0, %s25
      %s26 = sphi 0, %s23
      %s27 = sphi 0, %s26
      %s43 = sphi 0, %s27
      %s47 = sphi 0, %s47
      %s49 = sphi 0, %s47
      %s50 = sphi 0, %s49
      %s64 = sphi 0, %s50
      %s68 = sphi 0, %s68
      %s70 = sphi 0, %s68
      %s71 = sphi 0, %s70
      %s85 = sphi 0, %s71
      %s91 = sphi 0, %s93
      %s94 = sphi 0, %s91
      %s95 = sphi 0, %s94
      %s111 = sphi 0, %s95
    $region4: #{tpu_custom_call.1} parent=1 // loop_header_branch
      %16 = sbr.rel (%p14) target = $region8
    $region5: #{tpu_custom_call.1} parent=1 // loop_body
      %s18 = ssub.s32 %s13, 1
      %s19 = ssub.s32 %s13, 2
      %s20 = sadd.s32 %s13, 1
      %s21 = ssub.s32 %s13, %s20
      %p22 = scmp.eq.s32.totalorder %s21, 0
      %s24 = sadd.s32 %s23, 1
      %s25 = scalar_select %p22, %s23, %s24
      %p28 = pneg %p22
      %p29 = scmp.eq.s32.totalorder %s13, 1
      %p30 = por %p28, %p29
      %p31 = scmp.ne.s32.totalorder %s23, %s26
      %p32 = scmp.eq.s32.totalorder %s13, 0
      %p33 = por %p31, %p32
      %p34 = scmp.ne.s32.totalorder %s23, %s26
      %p35 = scmp.eq.s32.totalorder %s18, 1
      %p36 = por %p34, %p35
      %p37 = scmp.ne.s32.totalorder %s26, %s27
      %p38 = scmp.eq.s32.totalorder %s18, 0
      %p39 = por %p37, %p38
      %p40 = scmp.ne.s32.totalorder %s26, %s27
      %p41 = scmp.eq.s32.totalorder %s19, 1
      %p42 = por %p40, %p41
      %p44 = scmp.ne.s32.totalorder %s27, %s43
      %p45 = scmp.eq.s32.totalorder %s19, 0
      %p46 = por %p44, %p45
      %s48 = sadd.s32 %s47, 1
      %p51 = scmp.eq.s32.totalorder %s13, 1
      %p52 = scmp.ne.s32.totalorder %s47, %s49
      %p53 = scmp.eq.s32.totalorder %s13, 0
      %p54 = por %p52, %p53
      %p55 = scmp.ne.s32.totalorder %s47, %s49
      %p56 = scmp.eq.s32.totalorder %s18, 1
      %p57 = por %p55, %p56
      %p58 = scmp.ne.s32.totalorder %s49, %s50
      %p59 = scmp.eq.s32.totalorder %s18, 0
      %p60 = por %p58, %p59
      %p61 = scmp.ne.s32.totalorder %s49, %s50
      %p62 = scmp.eq.s32.totalorder %s19, 1
      %p63 = por %p61, %p62
      %p65 = scmp.ne.s32.totalorder %s50, %s64
      %p66 = scmp.eq.s32.totalorder %s19, 0
      %p67 = por %p65, %p66
      %s69 = sadd.s32 %s68, 1
      %p72 = scmp.eq.s32.totalorder %s13, 1
      %p73 = scmp.ne.s32.totalorder %s68, %s70
      %p74 = scmp.eq.s32.totalorder %s13, 0
      %p75 = por %p73, %p74
      %p76 = scmp.ne.s32.totalorder %s68, %s70
      %p77 = scmp.eq.s32.totalorder %s18, 1
      %p78 = por %p76, %p77
      %p79 = scmp.ne.s32.totalorder %s70, %s71
      %p80 = scmp.eq.s32.totalorder %s18, 0
      %p81 = por %p79, %p80
      %p82 = scmp.ne.s32.totalorder %s70, %s71
      %p83 = scmp.eq.s32.totalorder %s19, 1
      %p84 = por %p82, %p83
      %p86 = scmp.ne.s32.totalorder %s71, %s85
      %p87 = scmp.eq.s32.totalorder %s19, 0
      %p88 = por %p86, %p87
      %s89 = ssub.s32 %s13, %s20
      %p90 = scmp.eq.s32.totalorder %s89, 0
      %s92 = sadd.s32 %s91, 1
      %s93 = scalar_select %p90, %s91, %s92
      %p96 = pneg %p90
      %p97 = scmp.eq.s32.totalorder %s13, 1
      %p98 = por %p96, %p97
      %p99 = scmp.ne.s32.totalorder %s91, %s94
      %p100 = scmp.eq.s32.totalorder %s13, 0
      %p101 = por %p99, %p100
      %p102 = scmp.ne.s32.totalorder %s91, %s94
      %p103 = scmp.eq.s32.totalorder %s18, 1
      %p104 = por %p102, %p103
      %p105 = scmp.ne.s32.totalorder %s94, %s95
      %p106 = scmp.eq.s32.totalorder %s18, 0
      %p107 = por %p105, %p106
      %p108 = scmp.ne.s32.totalorder %s94, %s95
      %p109 = scmp.eq.s32.totalorder %s19, 1
      %p110 = por %p108, %p109
      %p112 = scmp.ne.s32.totalorder %s95, %s111
      %p113 = scmp.eq.s32.totalorder %s19, 0
      %p114 = por %p112, %p113
      %p115 = scmp.le.s32.totalorder 1, %s13
      %p116 = scmp.lt.s32.totalorder %s13, 3
      %p117 = pnand %p115, %p116
      %p118 = pneg %p117
      // Predicated region
      $region9: #{tpu_custom_call.1} parent=5 // pred_check
        _
      $region10: #{tpu_custom_call.1} parent=5 // pred_check_branch
        %120 = sbr.rel (%p117) target = $region12
      $region11: #{tpu_custom_call.1} parent=5 // pred_region
        %s121 = ssub.s32 %s13, 1
        // Predicated region
        $region13: #{tpu_custom_call.1} parent=11 // pred_check
          %p122 = pneg %p60
        $region14: #{tpu_custom_call.1} parent=11 // pred_check_branch
          %124 = sbr.rel (%p122) target = $region16
        $region15: #{tpu_custom_call.1} parent=11 // pred_region
          _
        $region16: #{tpu_custom_call.1} parent=11 // pred_fallthru
          _
        // Predicated region
        $region17: #{tpu_custom_call.1} parent=11 // pred_check
          %p125 = pneg %p81
        $region18: #{tpu_custom_call.1} parent=11 // pred_check_branch
          %127 = sbr.rel (%p125) target = $region20
        $region19: #{tpu_custom_call.1} parent=11 // pred_region
          _
        $region20: #{tpu_custom_call.1} parent=11 // pred_fallthru
          _
      $region12: #{tpu_custom_call.1} parent=5 // pred_fallthru
        _
      %p128 = scmp.lt.s32.totalorder %s13, 2
      // Predicated region
      $region21: #{tpu_custom_call.1} parent=5 // pred_check
        %p129 = pneg %p128
      $region22: #{tpu_custom_call.1} parent=5 // pred_check_branch
        %131 = sbr.rel (%p129) target = $region24
      $region23: #{tpu_custom_call.1} parent=5 // pred_region
        // Predicated region
        $region25: #{tpu_custom_call.1} parent=23 // pred_check
          %p132 = pneg %p33
        $region26: #{tpu_custom_call.1} parent=23 // pred_check_branch
          %134 = sbr.rel (%p132) target = $region28
        $region27: #{tpu_custom_call.1} parent=23 // pred_region
          %s135 = sand.u32 %s23, 1
          %s136 = scalar_lea.sflag [#allocation4], %s135
          %s137 = sand.u32 %s23, 1
          %s138 = smul.addr %s137, 256
          %s139 = scalar_lea.vmem [#allocation3], %s138
          %s140 = smul.u32 16, %s13
          %s142 = ssub.s32 4096, 4096
          %143 = vsyncadd %s136, %s142
          %s144 = smul.addr %s140, 2
          %s145 = smul.addr %s144, 128
          %s146 = scalar_lea.hbm %s0, %s145
          %s147 = sshll.u32 %s139, 4
          %s148 = int_to_ptr.vmem [resolvable:$true] %s147
          %153 = dma.hbm_to_vmem [thread:$0]  %s146, 4096, %s148, %s136, 128, 128, 8
        $region28: #{tpu_custom_call.1} parent=23 // pred_fallthru
          _
      $region24: #{tpu_custom_call.1} parent=5 // pred_fallthru
        _
      %p154 = scmp.le.s32.totalorder 1, %s13
      %p155 = scmp.lt.s32.totalorder %s13, 3
      %p156 = pnand %p154, %p155
      %p157 = pneg %p156
      // Predicated region
      $region29: #{tpu_custom_call.1} parent=5 // pred_check
        _
      $region30: #{tpu_custom_call.1} parent=5 // pred_check_branch
        %159 = sbr.rel (%p156) target = $region32
      $region31: #{tpu_custom_call.1} parent=5 // pred_region
        %s160 = ssub.s32 %s13, 1
        %s161 = sand.u32 %s26, 1
        %s162 = scalar_lea.sflag [#allocation4], %s161
        %s163 = sand.u32 %s26, 1
        %s164 = smul.addr %s163, 256
        %s165 = scalar_lea.vmem [#allocation3], %s164
        // Predicated region
        $region33: #{tpu_custom_call.1} parent=31 // pred_check
          %p166 = pneg %p39
        $region34: #{tpu_custom_call.1} parent=31 // pred_check_branch
          %168 = sbr.rel (%p166) target = $region36
        $region35: #{tpu_custom_call.1} parent=31 // pred_region
          %169 = dma.done %s162, 4096
        $region36: #{tpu_custom_call.1} parent=31 // pred_fallthru
          _
        %s170 = sand.u32 %s26, 1
        %s171 = scalar_lea.sflag [#allocation4], %s170
        %s172 = sand.u32 %s26, 1
        %s173 = smul.addr %s172, 256
        %s174 = scalar_lea.vmem [#allocation3], %s173
        %p175 = pneg %p39
        %p176 = pneg %p36
        %p177 = pneg %p60
        %p178 = pneg %p57
        %p179 = pneg %p81
        %p180 = pneg %p78
        %p181 = pneg %p107
        %p182 = pneg %p104
        %s183 = smul.u32 32, %s18
        %p184 = scmp.lt.s32.totalorder %s183, 63
        %s185 = scalar_select %p184, %s183, 63
        %s186 = smul.addr %s185, 8
        %s187 = scalar_lea.vmem %s3, %s186
        %s188 = smul.u32 16, %s18
        %s189 = smul.u32 32, %s18
        %p190 = scmp.lt.s32.totalorder %s189, 63
        %s191 = scalar_select %p190, %s189, 63
        %s192 = smul.addr %s191, 8
        %s193 = scalar_lea.vmem %s3, %s192
        %s194 = smul.u32 32, %s18
        %v195 = vld [vmem:[%s165] sm:$0xff]
        %v196 = vld [vmem:[%s165 + $0x8] sm:$0xff]
        %v197 = vld [vmem:[%s165 + $0x10] sm:$0xff]
        %v198 = vld [vmem:[%s165 + $0x18] sm:$0xff]
        %v199 = vld [vmem:[%s165 + $0x20] sm:$0xff]
        %v200 = vld [vmem:[%s165 + $0x28] sm:$0xff]
        %v201 = vld [vmem:[%s165 + $0x30] sm:$0xff]
        %v202 = vld [vmem:[%s165 + $0x38] sm:$0xff]
        %v203 = vld [vmem:[%s165 + $0x40] sm:$0xff]
        %v204 = vld [vmem:[%s165 + $0x48] sm:$0xff]
        %v205 = vld [vmem:[%s165 + $0x50] sm:$0xff]
        %v206 = vld [vmem:[%s165 + $0x58] sm:$0xff]
        %v207 = vld [vmem:[%s165 + $0x60] sm:$0xff]
        %v208 = vld [vmem:[%s165 + $0x68] sm:$0xff]
        %v209 = vld [vmem:[%s165 + $0x70] sm:$0xff]
        %v210 = vld [vmem:[%s165 + $0x78] sm:$0xff]
        %v211 = vld [vmem:[%s165 + $0x80] sm:$0xff]
        %v212 = vld [vmem:[%s165 + $0x88] sm:$0xff]
        %v213 = vld [vmem:[%s165 + $0x90] sm:$0xff]
        %v214 = vld [vmem:[%s165 + $0x98] sm:$0xff]
        %v215 = vld [vmem:[%s165 + $0xa0] sm:$0xff]
        %v216 = vld [vmem:[%s165 + $0xa8] sm:$0xff]
        %v217 = vld [vmem:[%s165 + $0xb0] sm:$0xff]
        %v218 = vld [vmem:[%s165 + $0xb8] sm:$0xff]
        %v219 = vld [vmem:[%s165 + $0xc0] sm:$0xff]
        %v220 = vld [vmem:[%s165 + $0xc8] sm:$0xff]
        %v221 = vld [vmem:[%s165 + $0xd0] sm:$0xff]
        %v222 = vld [vmem:[%s165 + $0xd8] sm:$0xff]
        %v223 = vld [vmem:[%s165 + $0xe0] sm:$0xff]
        %v224 = vld [vmem:[%s165 + $0xe8] sm:$0xff]
        %v225 = vld [vmem:[%s165 + $0xf0] sm:$0xff]
        %v226 = vld [vmem:[%s165 + $0xf8] sm:$0xff]
        %v227 = vld [vmem:[%s1] sm:$0xff]
        %v228 = vld [vmem:[%s1 + $0x8] sm:$0xff]
        %v229 = vld [vmem:[%s1 + $0x10] sm:$0xff]
        %v230 = vld [vmem:[%s1 + $0x18] sm:$0xff]
        %v231 = vld [vmem:[%s1 + $0x20] sm:$0xff]
        %v232 = vld [vmem:[%s1 + $0x28] sm:$0xff]
        %v233 = vld [vmem:[%s1 + $0x30] sm:$0xff]
        %v234 = vld [vmem:[%s1 + $0x38] sm:$0xff]
        %v235 = vld [vmem:[%s1 + $0x40] sm:$0xff]
        %v236 = vld [vmem:[%s1 + $0x48] sm:$0xff]
        %v237 = vld [vmem:[%s1 + $0x50] sm:$0xff]
        %v238 = vld [vmem:[%s1 + $0x58] sm:$0xff]
        %v239 = vld [vmem:[%s1 + $0x60] sm:$0xff]
        %v240 = vld [vmem:[%s1 + $0x68] sm:$0xff]
        %v241 = vld [vmem:[%s1 + $0x70] sm:$0xff]
        %v242 = vld [vmem:[%s1 + $0x78] sm:$0xff]
        %s243 = sld [smem:[#allocation2]]
        %v244 = vstv %s243
        %245 = vmatprep.subr.mxu0 0.0
        %v246 = vand.u32 %v227, 4294901760
        %247 = vmatpush1.msra.mxu0 %v246
        %248 = vmatprep.subr.mxu0 0.0
        %v249 = vand.u32 %v228, 4294901760
        %250 = vmatpush1.msra.mxu0 %v249
        %251 = vmatprep.subr.mxu0 0.0
        %v252 = vand.u32 %v229, 4294901760
        %253 = vmatpush1.msra.mxu0 %v252
        %254 = vmatprep.subr.mxu0 0.0
        %v255 = vand.u32 %v230, 4294901760
        %256 = vmatpush1.msra.mxu0 %v255
        %257 = vmatprep.subr.mxu0 0.0
        %v258 = vand.u32 %v231, 4294901760
        %259 = vmatpush1.msra.mxu0 %v258
        %260 = vmatprep.subr.mxu0 0.0
        %v261 = vand.u32 %v232, 4294901760
        %262 = vmatpush1.msra.mxu0 %v261
        %263 = vmatprep.subr.mxu0 0.0
        %v264 = vand.u32 %v233, 4294901760
        %265 = vmatpush1.msra.mxu0 %v264
        %266 = vmatprep.subr.mxu0 0.0
        %v267 = vand.u32 %v234, 4294901760
        %268 = vmatpush1.msra.mxu0 %v267
        %269 = vmatprep.subr.mxu0 0.0
        %v270 = vand.u32 %v235, 4294901760
        %271 = vmatpush1.msra.mxu0 %v270
        %272 = vmatprep.subr.mxu0 0.0
        %v273 = vand.u32 %v236, 4294901760
        %274 = vmatpush1.msra.mxu0 %v273
        %275 = vmatprep.subr.mxu0 0.0
        %v276 = vand.u32 %v237, 4294901760
        %277 = vmatpush1.msra.mxu0 %v276
        %278 = vmatprep.subr.mxu0 0.0
        %v279 = vand.u32 %v238, 4294901760
        %280 = vmatpush1.msra.mxu0 %v279
        %281 = vmatprep.subr.mxu0 0.0
        %v282 = vand.u32 %v239, 4294901760
        %283 = vmatpush1.msra.mxu0 %v282
        %284 = vmatprep.subr.mxu0 0.0
        %v285 = vand.u32 %v240, 4294901760
        %286 = vmatpush1.msra.mxu0 %v285
        %287 = vmatprep.subr.mxu0 0.0
        %v288 = vand.u32 %v241, 4294901760
        %289 = vmatpush1.msra.mxu0 %v288
        %290 = vmatprep.subr.mxu0 0.0
        %v291 = vand.u32 %v242, 4294901760
        %292 = vmatpush1.msra.mxu0 %v291
        %293 = vmatprep.subr.mxu0 0.0
        %294 = vmatpush1.msra.mxu0 0.0
        %295 = vmatprep.subr.mxu0 0.0
        %296 = vmatpush1.msra.mxu0 0.0
        %297 = vmatprep.subr.mxu0 0.0
        %298 = vmatpush1.msra.mxu0 0.0
        %299 = vmatprep.subr.mxu0 0.0
        %300 = vmatpush1.msra.mxu0 0.0
        %301 = vmatprep.subr.mxu0 0.0
        %302 = vmatpush1.msra.mxu0 0.0
        %303 = vmatprep.subr.mxu0 0.0
        %304 = vmatpush1.msra.mxu0 0.0
        %305 = vmatprep.subr.mxu0 0.0
        %306 = vmatpush1.msra.mxu0 0.0
        %307 = vmatprep.subr.mxu0 0.0
        %308 = vmatpush1.msra.mxu0 0.0
        %309 = vmatprep.subr.mxu0 0.0
        %310 = vmatpush1.msra.mxu0 0.0
        %311 = vmatprep.subr.mxu0 0.0
        %312 = vmatpush1.msra.mxu0 0.0
        %313 = vmatprep.subr.mxu0 0.0
        %314 = vmatpush1.msra.mxu0 0.0
        %315 = vmatprep.subr.mxu0 0.0
        %316 = vmatpush1.msra.mxu0 0.0
        %317 = vmatprep.subr.mxu0 0.0
        %318 = vmatpush1.msra.mxu0 0.0
        %319 = vmatprep.subr.mxu0 0.0
        %320 = vmatpush1.msra.mxu0 0.0
        %321 = vmatprep.subr.mxu0 0.0
        %322 = vmatpush1.msra.mxu0 0.0
        %323 = vmatprep.subr.mxu0 0.0
        %324 = vmatpush1.msra.mxu0 0.0
        %325 = vmatprep.mubr.f32.mxu0 0.0
        %v326 = vand.u32 %v195, 4294901760
        %v327 = vsub.f32 %v195, %v326
        %v328 = vand.u32 %v327, 4294901760
        %v329 = vsub.f32 %v327, %v328
        %v330 = vand.u32 %v329, 4294901760
        %331 = vmatmul.mubr.f32.gmra.mrb[0].mxu0 %v330
        %v332 = vpop.f32.mrb[0].mxu0
        %v333 = vadd.f32 %v244, %v332
        %v334 = vpop.f32.mrb[0].mxu0
        %335 = vmatprep.mubr.f32.mxu0 0.0
        %v336 = vand.u32 %v196, 4294901760
        %v337 = vsub.f32 %v196, %v336
        %v338 = vand.u32 %v337, 4294901760
        %v339 = vsub.f32 %v337, %v338
        %v340 = vand.u32 %v339, 4294901760
        %341 = vmatmul.mubr.f32.gmra.mrb[0].mxu0 %v340
        %v342 = vpop.f32.mrb[0].mxu0
        %v343 = vadd.f32 %v244, %v342
        %v344 = vpop.f32.mrb[0].mxu0
        %345 = vmatprep.mubr.f32.mxu0 0.0
        %v346 = vand.u32 %v197, 4294901760
        %v347 = vsub.f32 %v197, %v346
        %v348 = vand.u32 %v347, 4294901760
        %v349 = vsub.f32 %v347, %v348
        %v350 = vand.u32 %v349, 4294901760
        %351 = vmatmul.mubr.f32.gmra.mrb[0].mxu0 %v350
        %v352 = vpop.f32.mrb[0].mxu0
        %v353 = vadd.f32 %v244, %v352
        %v354 = vpop.f32.mrb[0].mxu0
        %355 = vmatprep.mubr.f32.mxu0 0.0
        %v356 = vand.u32 %v198, 4294901760
        %v357 = vsub.f32 %v198, %v356
        %v358 = vand.u32 %v357, 4294901760
        %v359 = vsub.f32 %v357, %v358
        %v360 = vand.u32 %v359, 4294901760
        %361 = vmatmul.mubr.f32.gmra.mrb[0].mxu0 %v360
        %v362 = vpop.f32.mrb[0].mxu0
        %v363 = vadd.f32 %v244, %v362
        %v364 = vpop.f32.mrb[0].mxu0
        %365 = vmatprep.mubr.f32.mxu0 0.0
        %v366 = vand.u32 %v199, 4294901760
        %v367 = vsub.f32 %v199, %v366
        %v368 = vand.u32 %v367, 4294901760
        %v369 = vsub.f32 %v367, %v368
        %v370 = vand.u32 %v369, 4294901760
        %371 = vmatmul.mubr.f32.gmra.mrb[0].mxu0 %v370
        %v372 = vpop.f32.mrb[0].mxu0
        %v373 = vadd.f32 %v244, %v372
        %v374 = vpop.f32.mrb[0].mxu0
        %375 = vmatprep.mubr.f32.mxu0 0.0
        %v376 = vand.u32 %v200, 4294901760
        %v377 = vsub.f32 %v200, %v376
        %v378 = vand.u32 %v377, 4294901760
        %v379 = vsub.f32 %v377, %v378
        %v380 = vand.u32 %v379, 4294901760
        %381 = vmatmul.mubr.f32.gmra.mrb[0].mxu0 %v380
        %v382 = vpop.f32.mrb[0].mxu0
        %v383 = vadd.f32 %v244, %v382
        %v384 = vpop.f32.mrb[0].mxu0
        %385 = vmatprep.mubr.f32.mxu0 0.0
        %v386 = vand.u32 %v201, 4294901760
        %v387 = vsub.f32 %v201, %v386
        %v388 = vand.u32 %v387, 4294901760
        %v389 = vsub.f32 %v387, %v388
        %v390 = vand.u32 %v389, 4294901760
        %391 = vmatmul.mubr.f32.gmra.mrb[0].mxu0 %v390
        %v392 = vpop.f32.mrb[0].mxu0
        %v393 = vadd.f32 %v244, %v392
        %v394 = vpop.f32.mrb[0].mxu0
        %395 = vmatprep.mubr.f32.mxu0 0.0
        %v396 = vand.u32 %v202, 4294901760
        %v397 = vsub.f32 %v202, %v396
        %v398 = vand.u32 %v397, 4294901760
        %v399 = vsub.f32 %v397, %v398
        %v400 = vand.u32 %v399, 4294901760
        %401 = vmatmul.mubr.f32.gmra.mrb[0].mxu0 %v400
        %v402 = vpop.f32.mrb[0].mxu0
        %v403 = vadd.f32 %v244, %v402
        %v404 = vpop.f32.mrb[0].mxu0
        %405 = vmatprep.mubr.f32.mxu0 0.0
        %v406 = vand.u32 %v203, 4294901760
        %v407 = vsub.f32 %v203, %v406
        %v408 = vand.u32 %v407, 4294901760
        %v409 = vsub.f32 %v407, %v408
        %v410 = vand.u32 %v409, 4294901760
        %411 = vmatmul.mubr.f32.gmra.mrb[0].mxu0 %v410
        %v412 = vpop.f32.mrb[0].mxu0
        %v413 = vadd.f32 %v244, %v412
        %v414 = vpop.f32.mrb[0].mxu0
        %415 = vmatprep.mubr.f32.mxu0 0.0
        %v416 = vand.u32 %v204, 4294901760
        %v417 = vsub.f32 %v204, %v416
        %v418 = vand.u32 %v417, 4294901760
        %v419 = vsub.f32 %v417, %v418
        %v420 = vand.u32 %v419, 4294901760
        %421 = vmatmul.mubr.f32.gmra.mrb[0].mxu0 %v420
        %v422 = vpop.f32.mrb[0].mxu0
        %v423 = vadd.f32 %v244, %v422
        %v424 = vpop.f32.mrb[0].mxu0
        %425 = vmatprep.mubr.f32.mxu0 0.0
        %v426 = vand.u32 %v205, 4294901760
        %v427 = vsub.f32 %v205, %v426
        %v428 = vand.u32 %v427, 4294901760
        %v429 = vsub.f32 %v427, %v428
        %v430 = vand.u32 %v429, 4294901760
        %431 = vmatmul.mubr.f32.gmra.mrb[0].mxu0 %v430
        %v432 = vpop.f32.mrb[0].mxu0
        %v433 = vadd.f32 %v244, %v432
        %v434 = vpop.f32.mrb[0].mxu0
        %435 = vmatprep.mubr.f32.mxu0 0.0
        %v436 = vand.u32 %v206, 4294901760
        %v437 = vsub.f32 %v206, %v436
        %v438 = vand.u32 %v437, 4294901760
        %v439 = vsub.f32 %v437, %v438
        %v440 = vand.u32 %v439, 4294901760
        %441 = vmatmul.mubr.f32.gmra.mrb[0].mxu0 %v440
        %v442 = vpop.f32.mrb[0].mxu0
        %v443 = vadd.f32 %v244, %v442
        %v444 = vpop.f32.mrb[0].mxu0
        %445 = vmatprep.mubr.f32.mxu0 0.0
        %v446 = vand.u32 %v207, 4294901760
        %v447 = vsub.f32 %v207, %v446
        %v448 = vand.u32 %v447, 4294901760
        %v449 = vsub.f32 %v447, %v448
        %v450 = vand.u32 %v449, 4294901760
        %451 = vmatmul.mubr.f32.gmra.mrb[0].mxu0 %v450
        %v452 = vpop.f32.mrb[0].mxu0
        %v453 = vadd.f32 %v244, %v452
        %v454 = vpop.f32.mrb[0].mxu0
        %455 = vmatprep.mubr.f32.mxu0 0.0
        %v456 = vand.u32 %v208, 4294901760
        %v457 = vsub.f32 %v208, %v456
        %v458 = vand.u32 %v457, 4294901760
        %v459 = vsub.f32 %v457, %v458
        %v460 = vand.u32 %v459, 4294901760
        %461 = vmatmul.mubr.f32.gmra.mrb[0].mxu0 %v460
        %v462 = vpop.f32.mrb[0].mxu0
        %v463 = vadd.f32 %v244, %v462
        %v464 = vpop.f32.mrb[0].mxu0
        %465 = vmatprep.mubr.f32.mxu0 0.0
        %v466 = vand.u32 %v209, 4294901760
        %v467 = vsub.f32 %v209, %v466
        %v468 = vand.u32 %v467, 4294901760
        %v469 = vsub.f32 %v467, %v468
        %v470 = vand.u32 %v469, 4294901760
        %471 = vmatmul.mubr.f32.gmra.mrb[0].mxu0 %v470
        %v472 = vpop.f32.mrb[0].mxu0
        %v473 = vadd.f32 %v244, %v472
        %v474 = vpop.f32.mrb[0].mxu0
        %475 = vmatprep.mubr.f32.mxu0 0.0
        %v476 = vand.u32 %v210, 4294901760
        %v477 = vsub.f32 %v210, %v476
        %v478 = vand.u32 %v477, 4294901760
        %v479 = vsub.f32 %v477, %v478
        %v480 = vand.u32 %v479, 4294901760
        %481 = vmatmul.mubr.f32.gmra.mrb[0].mxu0 %v480
        %v482 = vpop.f32.mrb[0].mxu0
        %v483 = vadd.f32 %v244, %v482
        %v484 = vpop.f32.mrb[0].mxu0
        %485 = vmatprep.mubr.f32.mxu0 0.0
        %v486 = vand.u32 %v211, 4294901760
        %v487 = vsub.f32 %v211, %v486
        %v488 = vand.u32 %v487, 4294901760
        %v489 = vsub.f32 %v487, %v488
        %v490 = vand.u32 %v489, 4294901760
        %491 = vmatmul.mubr.f32.gmra.mrb[0].mxu0 %v490
        %v492 = vpop.f32.mrb[0].mxu0
        %v493 = vadd.f32 %v244, %v492
        %v494 = vpop.f32.mrb[0].mxu0
        %495 = vmatprep.mubr.f32.mxu0 0.0
        %v496 = vand.u32 %v212, 4294901760
        %v497 = vsub.f32 %v212, %v496
        %v498 = vand.u32 %v497, 4294901760
        %v499 = vsub.f32 %v497, %v498
        %v500 = vand.u32 %v499, 4294901760
        %501 = vmatmul.mubr.f32.gmra.mrb[0].mxu0 %v500
        %v502 = vpop.f32.mrb[0].mxu0
        %v503 = vadd.f32 %v244, %v502
        %v504 = vpop.f32.mrb[0].mxu0
        %505 = vmatprep.mubr.f32.mxu0 0.0
        %v506 = vand.u32 %v213, 4294901760
        %v507 = vsub.f32 %v213, %v506
        %v508 = vand.u32 %v507, 4294901760
        %v509 = vsub.f32 %v507, %v508
        %v510 = vand.u32 %v509, 4294901760
        %511 = vmatmul.mubr.f32.gmra.mrb[0].mxu0 %v510
        %v512 = vpop.f32.mrb[0].mxu0
        %v513 = vadd.f32 %v244, %v512
        %v514 = vpop.f32.mrb[0].mxu0
        %515 = vmatprep.mubr.f32.mxu0 0.0
        %v516 = vand.u32 %v214, 4294901760
        %v517 = vsub.f32 %v214, %v516
        %v518 = vand.u32 %v517, 4294901760
        %v519 = vsub.f32 %v517, %v518
        %v520 = vand.u32 %v519, 4294901760
        %521 = vmatmul.mubr.f32.gmra.mrb[0].mxu0 %v520
        %v522 = vpop.f32.mrb[0].mxu0
        %v523 = vadd.f32 %v244, %v522
        %v524 = vpop.f32.mrb[0].mxu0
        %525 = vmatprep.mubr.f32.mxu0 0.0
        %v526 = vand.u32 %v215, 4294901760
        %v527 = vsub.f32 %v215, %v526
        %v528 = vand.u32 %v527, 4294901760
        %v529 = vsub.f32 %v527, %v528
        %v530 = vand.u32 %v529, 4294901760
        %531 = vmatmul.mubr.f32.gmra.mrb[0].mxu0 %v530
        %v532 = vpop.f32.mrb[0].mxu0
        %v533 = vadd.f32 %v244, %v532
        %v534 = vpop.f32.mrb[0].mxu0
        %535 = vmatprep.mubr.f32.mxu0 0.0
        %v536 = vand.u32 %v216, 4294901760
        %v537 = vsub.f32 %v216, %v536
        %v538 = vand.u32 %v537, 4294901760
        %v539 = vsub.f32 %v537, %v538
        %v540 = vand.u32 %v539, 4294901760
        %541 = vmatmul.mubr.f32.gmra.mrb[0].mxu0 %v540
        %v542 = vpop.f32.mrb[0].mxu0
        %v543 = vadd.f32 %v244, %v542
        %v544 = vpop.f32.mrb[0].mxu0
        %545 = vmatprep.mubr.f32.mxu0 0.0
        %v546 = vand.u32 %v217, 4294901760
        %v547 = vsub.f32 %v217, %v546
        %v548 = vand.u32 %v547, 4294901760
        %v549 = vsub.f32 %v547, %v548
        %v550 = vand.u32 %v549, 4294901760
        %551 = vmatmul.mubr.f32.gmra.mrb[0].mxu0 %v550
        %v552 = vpop.f32.mrb[0].mxu0
        %v553 = vadd.f32 %v244, %v552
        %v554 = vpop.f32.mrb[0].mxu0
        %555 = vmatprep.mubr.f32.mxu0 0.0
        %v556 = vand.u32 %v218, 4294901760
        %v557 = vsub.f32 %v218, %v556
        %v558 = vand.u32 %v557, 4294901760
        %v559 = vsub.f32 %v557, %v558
        %v560 = vand.u32 %v559, 4294901760
        %561 = vmatmul.mubr.f32.gmra.mrb[0].mxu0 %v560
        %v562 = vpop.f32.mrb[0].mxu0
        %v563 = vadd.f32 %v244, %v562
        %v564 = vpop.f32.mrb[0].mxu0
        %565 = vmatprep.mubr.f32.mxu0 0.0
        %v566 = vand.u32 %v219, 4294901760
        %v567 = vsub.f32 %v219, %v566
        %v568 = vand.u32 %v567, 4294901760
        %v569 = vsub.f32 %v567, %v568
        %v570 = vand.u32 %v569, 4294901760
        %571 = vmatmul.mubr.f32.gmra.mrb[0].mxu0 %v570
        %v572 = vpop.f32.mrb[0].mxu0
        %v573 = vadd.f32 %v244, %v572
        %v574 = vpop.f32.mrb[0].mxu0
        %575 = vmatprep.mubr.f32.mxu0 0.0
        %v576 = vand.u32 %v220, 4294901760
        %v577 = vsub.f32 %v220, %v576
        %v578 = vand.u32 %v577, 4294901760
        %v579 = vsub.f32 %v577, %v578
        %v580 = vand.u32 %v579, 4294901760
        %581 = vmatmul.mubr.f32.gmra.mrb[0].mxu0 %v580
        %v582 = vpop.f32.mrb[0].mxu0
        %v583 = vadd.f32 %v244, %v582
        %v584 = vpop.f32.mrb[0].mxu0
        %585 = vmatprep.mubr.f32.mxu0 0.0
        %v586 = vand.u32 %v221, 4294901760
        %v587 = vsub.f32 %v221, %v586
        %v588 = vand.u32 %v587, 4294901760
        %v589 = vsub.f32 %v587, %v588
        %v590 = vand.u32 %v589, 4294901760
        %591 = vmatmul.mubr.f32.gmra.mrb[0].mxu0 %v590
        %v592 = vpop.f32.mrb[0].mxu0
        %v593 = vadd.f32 %v244, %v592
        %v594 = vpop.f32.mrb[0].mxu0
        %595 = vmatprep.mubr.f32.mxu0 0.0
        %v596 = vand.u32 %v222, 4294901760
        %v597 = vsub.f32 %v222, %v596
        %v598 = vand.u32 %v597, 4294901760
        %v599 = vsub.f32 %v597, %v598
        %v600 = vand.u32 %v599, 4294901760
        %601 = vmatmul.mubr.f32.gmra.mrb[0].mxu0 %v600
        %v602 = vpop.f32.mrb[0].mxu0
        %v603 = vadd.f32 %v244, %v602
        %v604 = vpop.f32.mrb[0].mxu0
        %605 = vmatprep.mubr.f32.mxu0 0.0
        %v606 = vand.u32 %v223, 4294901760
        %v607 = vsub.f32 %v223, %v606
        %v608 = vand.u32 %v607, 4294901760
        %v609 = vsub.f32 %v607, %v608
        %v610 = vand.u32 %v609, 4294901760
        %611 = vmatmul.mubr.f32.gmra.mrb[0].mxu0 %v610
        %v612 = vpop.f32.mrb[0].mxu0
        %v613 = vadd.f32 %v244, %v612
        %v614 = vpop.f32.mrb[0].mxu0
        %615 = vmatprep.mubr.f32.mxu0 0.0
        %v616 = vand.u32 %v224, 4294901760
        %v617 = vsub.f32 %v224, %v616
        %v618 = vand.u32 %v617, 4294901760
        %v619 = vsub.f32 %v617, %v618
        %v620 = vand.u32 %v619, 4294901760
        %621 = vmatmul.mubr.f32.gmra.mrb[0].mxu0 %v620
        %v622 = vpop.f32.mrb[0].mxu0
        %v623 = vadd.f32 %v244, %v622
        %v624 = vpop.f32.mrb[0].mxu0
        %625 = vmatprep.mubr.f32.mxu0 0.0
        %v626 = vand.u32 %v225, 4294901760
        %v627 = vsub.f32 %v225, %v626
        %v628 = vand.u32 %v627, 4294901760
        %v629 = vsub.f32 %v627, %v628
        %v630 = vand.u32 %v629, 4294901760
        %631 = vmatmul.mubr.f32.gmra.mrb[0].mxu0 %v630
        %v632 = vpop.f32.mrb[0].mxu0
        %v633 = vadd.f32 %v244, %v632
        %v634 = vpop.f32.mrb[0].mxu0
        %635 = vmatprep.mubr.f32.mxu0 0.0
        %v636 = vand.u32 %v226, 4294901760
        %v637 = vsub.f32 %v226, %v636
        %v638 = vand.u32 %v637, 4294901760
        %v639 = vsub.f32 %v637, %v638
        %v640 = vand.u32 %v639, 4294901760
        %641 = vmatmul.mubr.f32.gmra.mrb[0].mxu0 %v640
        %v642 = vpop.f32.mrb[0].mxu0
        %v643 = vadd.f32 %v244, %v642
        %v644 = vpop.f32.mrb[0].mxu0
        %645 = vdwg.mxu0
        %646 = vmatprep.subr.mxu0 0.0
        %v647 = vand.u32 %v227, 4294901760
        %v648 = vsub.f32 %v227, %v647
        %v649 = vand.u32 %v648, 4294901760
        %v650 = vsub.f32 %v648, %v649
        %v651 = vand.u32 %v650, 4294901760
        %652 = vmatpush1.msra.mxu0 %v651
        %653 = vmatprep.subr.mxu0 0.0
        %v654 = vand.u32 %v228, 4294901760
        %v655 = vsub.f32 %v228, %v654
        %v656 = vand.u32 %v655, 4294901760
        %v657 = vsub.f32 %v655, %v656
        %v658 = vand.u32 %v657, 4294901760
        %659 = vmatpush1.msra.mxu0 %v658
        %660 = vmatprep.subr.mxu0 0.0
        %v661 = vand.u32 %v229, 4294901760
        %v662 = vsub.f32 %v229, %v661
        %v663 = vand.u32 %v662, 4294901760
        %v664 = vsub.f32 %v662, %v663
        %v665 = vand.u32 %v664, 4294901760
        %666 = vmatpush1.msra.mxu0 %v665
        %667 = vmatprep.subr.mxu0 0.0
        %v668 = vand.u32 %v230, 4294901760
        %v669 = vsub.f32 %v230, %v668
        %v670 = vand.u32 %v669, 4294901760
        %v671 = vsub.f32 %v669, %v670
        %v672 = vand.u32 %v671, 4294901760
        %673 = vmatpush1.msra.mxu0 %v672
        %674 = vmatprep.subr.mxu0 0.0
        %v675 = vand.u32 %v231, 4294901760
        %v676 = vsub.f32 %v231, %v675
        %v677 = vand.u32 %v676, 4294901760
        %v678 = vsub.f32 %v676, %v677
        %v679 = vand.u32 %v678, 4294901760
        %680 = vmatpush1.msra.mxu0 %v679
        %681 = vmatprep.subr.mxu0 0.0
        %v682 = vand.u32 %v232, 4294901760
        %v683 = vsub.f32 %v232, %v682
        %v684 = vand.u32 %v683, 4294901760
        %v685 = vsub.f32 %v683, %v684
        %v686 = vand.u32 %v685, 4294901760
        %687 = vmatpush1.msra.mxu0 %v686
        %688 = vmatprep.subr.mxu0 0.0
        %v689 = vand.u32 %v233, 4294901760
        %v690 = vsub.f32 %v233, %v689
        %v691 = vand.u32 %v690, 4294901760
        %v692 = vsub.f32 %v690, %v691
        %v693 = vand.u32 %v692, 4294901760
        %694 = vmatpush1.msra.mxu0 %v693
        %695 = vmatprep.subr.mxu0 0.0
        %v696 = vand.u32 %v234, 4294901760
        %v697 = vsub.f32 %v234, %v696
        %v698 = vand.u32 %v697, 4294901760
        %v699 = vsub.f32 %v697, %v698
        %v700 = vand.u32 %v699, 4294901760
        %701 = vmatpush1.msra.mxu0 %v700
        %702 = vmatprep.subr.mxu0 0.0
        %v703 = vand.u32 %v235, 4294901760
        %v704 = vsub.f32 %v235, %v703
        %v705 = vand.u32 %v704, 4294901760
        %v706 = vsub.f32 %v704, %v705
        %v707 = vand.u32 %v706, 4294901760
        %708 = vmatpush1.msra.mxu0 %v707
        %709 = vmatprep.subr.mxu0 0.0
        %v710 = vand.u32 %v236, 4294901760
        %v711 = vsub.f32 %v236, %v710
        %v712 = vand.u32 %v711, 4294901760
        %v713 = vsub.f32 %v711, %v712
        %v714 = vand.u32 %v713, 4294901760
        %715 = vmatpush1.msra.mxu0 %v714
        %716 = vmatprep.subr.mxu0 0.0
        %v717 = vand.u32 %v237, 4294901760
        %v718 = vsub.f32 %v237, %v717
        %v719 = vand.u32 %v718, 4294901760
        %v720 = vsub.f32 %v718, %v719
        %v721 = vand.u32 %v720, 4294901760
        %722 = vmatpush1.msra.mxu0 %v721
        %723 = vmatprep.subr.mxu0 0.0
        %v724 = vand.u32 %v238, 4294901760
        %v725 = vsub.f32 %v238, %v724
        %v726 = vand.u32 %v725, 4294901760
        %v727 = vsub.f32 %v725, %v726
        %v728 = vand.u32 %v727, 4294901760
        %729 = vmatpush1.msra.mxu0 %v728
        %730 = vmatprep.subr.mxu0 0.0
        %v731 = vand.u32 %v239, 4294901760
        %v732 = vsub.f32 %v239, %v731
        %v733 = vand.u32 %v732, 4294901760
        %v734 = vsub.f32 %v732, %v733
        %v735 = vand.u32 %v734, 4294901760
        %736 = vmatpush1.msra.mxu0 %v735
        %737 = vmatprep.subr.mxu0 0.0
        %v738 = vand.u32 %v240, 4294901760
        %v739 = vsub.f32 %v240, %v738
        %v740 = vand.u32 %v739, 4294901760
        %v741 = vsub.f32 %v739, %v740
        %v742 = vand.u32 %v741, 4294901760
        %743 = vmatpush1.msra.mxu0 %v742
        %744 = vmatprep.subr.mxu0 0.0
        %v745 = vand.u32 %v241, 4294901760
        %v746 = vsub.f32 %v241, %v745
        %v747 = vand.u32 %v746, 4294901760
        %v748 = vsub.f32 %v746, %v747
        %v749 = vand.u32 %v748, 4294901760
        %750 = vmatpush1.msra.mxu0 %v749
        %751 = vmatprep.subr.mxu0 0.0
        %v752 = vand.u32 %v242, 4294901760
        %v753 = vsub.f32 %v242, %v752
        %v754 = vand.u32 %v753, 4294901760
        %v755 = vsub.f32 %v753, %v754
        %v756 = vand.u32 %v755, 4294901760
        %757 = vmatpush1.msra.mxu0 %v756
        %758 = vmatprep.subr.mxu0 0.0
        %759 = vmatpush1.msra.mxu0 0.0
        %760 = vmatprep.subr.mxu0 0.0
        %761 = vmatpush1.msra.mxu0 0.0
        %762 = vmatprep.subr.mxu0 0.0
        %763 = vmatpush1.msra.mxu0 0.0
        %764 = vmatprep.subr.mxu0 0.0
        %765 = vmatpush1.msra.mxu0 0.0
        %766 = vmatprep.subr.mxu0 0.0
        %767 = vmatpush1.msra.mxu0 0.0
        %768 = vmatprep.subr.mxu0 0.0
        %769 = vmatpush1.msra.mxu0 0.0
        %770 = vmatprep.subr.mxu0 0.0
        %771 = vmatpush1.msra.mxu0 0.0
        %772 = vmatprep.subr.mxu0 0.0
        %773 = vmatpush1.msra.mxu0 0.0
        %774 = vmatprep.subr.mxu0 0.0
        %775 = vmatpush1.msra.mxu0 0.0
        %776 = vmatprep.subr.mxu0 0.0
        %777 = vmatpush1.msra.mxu0 0.0
        %778 = vmatprep.subr.mxu0 0.0
        %779 = vmatpush1.msra.mxu0 0.0
        %780 = vmatprep.subr.mxu0 0.0
        %781 = vmatpush1.msra.mxu0 0.0
        %782 = vmatprep.subr.mxu0 0.0
        %783 = vmatpush1.msra.mxu0 0.0
        %784 = vmatprep.subr.mxu0 0.0
        %785 = vmatpush1.msra.mxu0 0.0
        %786 = vmatprep.subr.mxu0 0.0
        %787 = vmatpush1.msra.mxu0 0.0
        %788 = vmatprep.subr.mxu0 0.0
        %789 = vmatpush1.msra.mxu0 0.0
        %790 = vmatprep.mubr.f32.mxu0 0.0
        %v791 = vand.u32 %v195, 4294901760
        %792 = vmatmul.mubr.f32.gmra.mrb[0].mxu0 %v791
        %v793 = vpop.f32.mrb[0].mxu0
        %v794 = vadd.f32 %v333, %v793
        %v795 = vpop.f32.mrb[0].mxu0
        %796 = vmatprep.mubr.f32.mxu0 0.0
        %v797 = vand.u32 %v196, 4294901760
        %798 = vmatmul.mubr.f32.gmra.mrb[0].mxu0 %v797
        %v799 = vpop.f32.mrb[0].mxu0
        %v800 = vadd.f32 %v343, %v799
        %v801 = vpop.f32.mrb[0].mxu0
        %802 = vmatprep.mubr.f32.mxu0 0.0
        %v803 = vand.u32 %v197, 4294901760
        %804 = vmatmul.mubr.f32.gmra.mrb[0].mxu0 %v803
        %v805 = vpop.f32.mrb[0].mxu0
        %v806 = vadd.f32 %v353, %v805
        %v807 = vpop.f32.mrb[0].mxu0
        %808 = vmatprep.mubr.f32.mxu0 0.0
        %v809 = vand.u32 %v198, 4294901760
        %810 = vmatmul.mubr.f32.gmra.mrb[0].mxu0 %v809
        %v811 = vpop.f32.mrb[0].mxu0
        %v812 = vadd.f32 %v363, %v811
        %v813 = vpop.f32.mrb[0].mxu0
        %814 = vmatprep.mubr.f32.mxu0 0.0
        %v815 = vand.u32 %v199, 4294901760
        %816 = vmatmul.mubr.f32.gmra.mrb[0].mxu0 %v815
        %v817 = vpop.f32.mrb[0].mxu0
        %v818 = vadd.f32 %v373, %v817
        %v819 = vpop.f32.mrb[0].mxu0
        %820 = vmatprep.mubr.f32.mxu0 0.0
        %v821 = vand.u32 %v200, 4294901760
        %822 = vmatmul.mubr.f32.gmra.mrb[0].mxu0 %v821
        %v823 = vpop.f32.mrb[0].mxu0
        %v824 = vadd.f32 %v383, %v823
        %v825 = vpop.f32.mrb[0].mxu0
        %826 = vmatprep.mubr.f32.mxu0 0.0
        %v827 = vand.u32 %v201, 4294901760
        %828 = vmatmul.mubr.f32.gmra.mrb[0].mxu0 %v827
        %v829 = vpop.f32.mrb[0].mxu0
        %v830 = vadd.f32 %v393, %v829
        %v831 = vpop.f32.mrb[0].mxu0
        %832 = vmatprep.mubr.f32.mxu0 0.0
        %v833 = vand.u32 %v202, 4294901760
        %834 = vmatmul.mubr.f32.gmra.mrb[0].mxu0 %v833
        %v835 = vpop.f32.mrb[0].mxu0
        %v836 = vadd.f32 %v403, %v835
        %v837 = vpop.f32.mrb[0].mxu0
        %838 = vmatprep.mubr.f32.mxu0 0.0
        %v839 = vand.u32 %v203, 4294901760
        %840 = vmatmul.mubr.f32.gmra.mrb[0].mxu0 %v839
        %v841 = vpop.f32.mrb[0].mxu0
        %v842 = vadd.f32 %v413, %v841
        %v843 = vpop.f32.mrb[0].mxu0
        %844 = vmatprep.mubr.f32.mxu0 0.0
        %v845 = vand.u32 %v204, 4294901760
        %846 = vmatmul.mubr.f32.gmra.mrb[0].mxu0 %v845
        %v847 = vpop.f32.mrb[0].mxu0
        %v848 = vadd.f32 %v423, %v847
        %v849 = vpop.f32.mrb[0].mxu0
        %850 = vmatprep.mubr.f32.mxu0 0.0
        %v851 = vand.u32 %v205, 4294901760
        %852 = vmatmul.mubr.f32.gmra.mrb[0].mxu0 %v851
        %v853 = vpop.f32.mrb[0].mxu0
        %v854 = vadd.f32 %v433, %v853
        %v855 = vpop.f32.mrb[0].mxu0
        %856 = vmatprep.mubr.f32.mxu0 0.0
        %v857 = vand.u32 %v206, 4294901760
        %858 = vmatmul.mubr.f32.gmra.mrb[0].mxu0 %v857
        %v859 = vpop.f32.mrb[0].mxu0
        %v860 = vadd.f32 %v443, %v859
        %v861 = vpop.f32.mrb[0].mxu0
        %862 = vmatprep.mubr.f32.mxu0 0.0
        %v863 = vand.u32 %v207, 4294901760
        %864 = vmatmul.mubr.f32.gmra.mrb[0].mxu0 %v863
        %v865 = vpop.f32.mrb[0].mxu0
        %v866 = vadd.f32 %v453, %v865
        %v867 = vpop.f32.mrb[0].mxu0
        %868 = vmatprep.mubr.f32.mxu0 0.0
        %v869 = vand.u32 %v208, 4294901760
        %870 = vmatmul.mubr.f32.gmra.mrb[0].mxu0 %v869
        %v871 = vpop.f32.mrb[0].mxu0
        %v872 = vadd.f32 %v463, %v871
        %v873 = vpop.f32.mrb[0].mxu0
        %874 = vmatprep.mubr.f32.mxu0 0.0
        %v875 = vand.u32 %v209, 4294901760
        %876 = vmatmul.mubr.f32.gmra.mrb[0].mxu0 %v875
        %v877 = vpop.f32.mrb[0].mxu0
        %v878 = vadd.f32 %v473, %v877
        %v879 = vpop.f32.mrb[0].mxu0
        %880 = vmatprep.mubr.f32.mxu0 0.0
        %v881 = vand.u32 %v210, 4294901760
        %882 = vmatmul.mubr.f32.gmra.mrb[0].mxu0 %v881
        %v883 = vpop.f32.mrb[0].mxu0
        %v884 = vadd.f32 %v483, %v883
        %v885 = vpop.f32.mrb[0].mxu0
        %886 = vmatprep.mubr.f32.mxu0 0.0
        %v887 = vand.u32 %v211, 4294901760
        %888 = vmatmul.mubr.f32.gmra.mrb[0].mxu0 %v887
        %v889 = vpop.f32.mrb[0].mxu0
        %v890 = vadd.f32 %v493, %v889
        %v891 = vpop.f32.mrb[0].mxu0
        %892 = vmatprep.mubr.f32.mxu0 0.0
        %v893 = vand.u32 %v212, 4294901760
        %894 = vmatmul.mubr.f32.gmra.mrb[0].mxu0 %v893
        %v895 = vpop.f32.mrb[0].mxu0
        %v896 = vadd.f32 %v503, %v895
        %v897 = vpop.f32.mrb[0].mxu0
        %898 = vmatprep.mubr.f32.mxu0 0.0
        %v899 = vand.u32 %v213, 4294901760
        %900 = vmatmul.mubr.f32.gmra.mrb[0].mxu0 %v899
        %v901 = vpop.f32.mrb[0].mxu0
        %v902 = vadd.f32 %v513, %v901
        %v903 = vpop.f32.mrb[0].mxu0
        %904 = vmatprep.mubr.f32.mxu0 0.0
        %v905 = vand.u32 %v214, 4294901760
        %906 = vmatmul.mubr.f32.gmra.mrb[0].mxu0 %v905
        %v907 = vpop.f32.mrb[0].mxu0
        %v908 = vadd.f32 %v523, %v907
        %v909 = vpop.f32.mrb[0].mxu0
        %910 = vmatprep.mubr.f32.mxu0 0.0
        %v911 = vand.u32 %v215, 4294901760
        %912 = vmatmul.mubr.f32.gmra.mrb[0].mxu0 %v911
        %v913 = vpop.f32.mrb[0].mxu0
        %v914 = vadd.f32 %v533, %v913
        %v915 = vpop.f32.mrb[0].mxu0
        %916 = vmatprep.mubr.f32.mxu0 0.0
        %v917 = vand.u32 %v216, 4294901760
        %918 = vmatmul.mubr.f32.gmra.mrb[0].mxu0 %v917
        %v919 = vpop.f32.mrb[0].mxu0
        %v920 = vadd.f32 %v543, %v919
        %v921 = vpop.f32.mrb[0].mxu0
        %922 = vmatprep.mubr.f32.mxu0 0.0
        %v923 = vand.u32 %v217, 4294901760
        %924 = vmatmul.mubr.f32.gmra.mrb[0].mxu0 %v923
        %v925 = vpop.f32.mrb[0].mxu0
        %v926 = vadd.f32 %v553, %v925
        %v927 = vpop.f32.mrb[0].mxu0
        %928 = vmatprep.mubr.f32.mxu0 0.0
        %v929 = vand.u32 %v218, 4294901760
        %930 = vmatmul.mubr.f32.gmra.mrb[0].mxu0 %v929
        %v931 = vpop.f32.mrb[0].mxu0
        %v932 = vadd.f32 %v563, %v931
        %v933 = vpop.f32.mrb[0].mxu0
        %934 = vmatprep.mubr.f32.mxu0 0.0
        %v935 = vand.u32 %v219, 4294901760
        %936 = vmatmul.mubr.f32.gmra.mrb[0].mxu0 %v935
        %v937 = vpop.f32.mrb[0].mxu0
        %v938 = vadd.f32 %v573, %v937
        %v939 = vpop.f32.mrb[0].mxu0
        %940 = vmatprep.mubr.f32.mxu0 0.0
        %v941 = vand.u32 %v220, 4294901760
        %942 = vmatmul.mubr.f32.gmra.mrb[0].mxu0 %v941
        %v943 = vpop.f32.mrb[0].mxu0
        %v944 = vadd.f32 %v583, %v943
        %v945 = vpop.f32.mrb[0].mxu0
        %946 = vmatprep.mubr.f32.mxu0 0.0
        %v947 = vand.u32 %v221, 4294901760
        %948 = vmatmul.mubr.f32.gmra.mrb[0].mxu0 %v947
        %v949 = vpop.f32.mrb[0].mxu0
        %v950 = vadd.f32 %v593, %v949
        %v951 = vpop.f32.mrb[0].mxu0
        %952 = vmatprep.mubr.f32.mxu0 0.0
        %v953 = vand.u32 %v222, 4294901760
        %954 = vmatmul.mubr.f32.gmra.mrb[0].mxu0 %v953
        %v955 = vpop.f32.mrb[0].mxu0
        %v956 = vadd.f32 %v603, %v955
        %v957 = vpop.f32.mrb[0].mxu0
        %958 = vmatprep.mubr.f32.mxu0 0.0
        %v959 = vand.u32 %v223, 4294901760
        %960 = vmatmul.mubr.f32.gmra.mrb[0].mxu0 %v959
        %v961 = vpop.f32.mrb[0].mxu0
        %v962 = vadd.f32 %v613, %v961
        %v963 = vpop.f32.mrb[0].mxu0
        %964 = vmatprep.mubr.f32.mxu0 0.0
        %v965 = vand.u32 %v224, 4294901760
        %966 = vmatmul.mubr.f32.gmra.mrb[0].mxu0 %v965
        %v967 = vpop.f32.mrb[0].mxu0
        %v968 = vadd.f32 %v623, %v967
        %v969 = vpop.f32.mrb[0].mxu0
        %970 = vmatprep.mubr.f32.mxu0 0.0
        %v971 = vand.u32 %v225, 4294901760
        %972 = vmatmul.mubr.f32.gmra.mrb[0].mxu0 %v971
        %v973 = vpop.f32.mrb[0].mxu0
        %v974 = vadd.f32 %v633, %v973
        %v975 = vpop.f32.mrb[0].mxu0
        %976 = vmatprep.mubr.f32.mxu0 0.0
        %v977 = vand.u32 %v226, 4294901760
        %978 = vmatmul.mubr.f32.gmra.mrb[0].mxu0 %v977
        %v979 = vpop.f32.mrb[0].mxu0
        %v980 = vadd.f32 %v643, %v979
        %v981 = vpop.f32.mrb[0].mxu0
        %982 = vdwg.mxu0
        %983 = vmatprep.subr.mxu0 0.0
        %v984 = vand.u32 %v227, 4294901760
        %v985 = vsub.f32 %v227, %v984
        %986 = vmatpush1.msra.mxu0 %v985
        %987 = vmatprep.subr.mxu0 0.0
        %v988 = vand.u32 %v228, 4294901760
        %v989 = vsub.f32 %v228, %v988
        %990 = vmatpush1.msra.mxu0 %v989
        %991 = vmatprep.subr.mxu0 0.0
        %v992 = vand.u32 %v229, 4294901760
        %v993 = vsub.f32 %v229, %v992
        %994 = vmatpush1.msra.mxu0 %v993
        %995 = vmatprep.subr.mxu0 0.0
        %v996 = vand.u32 %v230, 4294901760
        %v997 = vsub.f32 %v230, %v996
        %998 = vmatpush1.msra.mxu0 %v997
        %999 = vmatprep.subr.mxu0 0.0
        %v1000 = vand.u32 %v231, 4294901760
        %v1001 = vsub.f32 %v231, %v1000
        %1002 = vmatpush1.msra.mxu0 %v1001
        %1003 = vmatprep.subr.mxu0 0.0
        %v1004 = vand.u32 %v232, 4294901760
        %v1005 = vsub.f32 %v232, %v1004
        %1006 = vmatpush1.msra.mxu0 %v1005
        %1007 = vmatprep.subr.mxu0 0.0
        %v1008 = vand.u32 %v233, 4294901760
        %v1009 = vsub.f32 %v233, %v1008
        %1010 = vmatpush1.msra.mxu0 %v1009
        %1011 = vmatprep.subr.mxu0 0.0
        %v1012 = vand.u32 %v234, 4294901760
        %v1013 = vsub.f32 %v234, %v1012
        %1014 = vmatpush1.msra.mxu0 %v1013
        %1015 = vmatprep.subr.mxu0 0.0
        %v1016 = vand.u32 %v235, 4294901760
        %v1017 = vsub.f32 %v235, %v1016
        %1018 = vmatpush1.msra.mxu0 %v1017
        %1019 = vmatprep.subr.mxu0 0.0
        %v1020 = vand.u32 %v236, 4294901760
        %v1021 = vsub.f32 %v236, %v1020
        %1022 = vmatpush1.msra.mxu0 %v1021
        %1023 = vmatprep.subr.mxu0 0.0
        %v1024 = vand.u32 %v237, 4294901760
        %v1025 = vsub.f32 %v237, %v1024
        %1026 = vmatpush1.msra.mxu0 %v1025
        %1027 = vmatprep.subr.mxu0 0.0
        %v1028 = vand.u32 %v238, 4294901760
        %v1029 = vsub.f32 %v238, %v1028
        %1030 = vmatpush1.msra.mxu0 %v1029
        %1031 = vmatprep.subr.mxu0 0.0
        %v1032 = vand.u32 %v239, 4294901760
        %v1033 = vsub.f32 %v239, %v1032
        %1034 = vmatpush1.msra.mxu0 %v1033
        %1035 = vmatprep.subr.mxu0 0.0
        %v1036 = vand.u32 %v240, 4294901760
        %v1037 = vsub.f32 %v240, %v1036
        %1038 = vmatpush1.msra.mxu0 %v1037
        %1039 = vmatprep.subr.mxu0 0.0
        %v1040 = vand.u32 %v241, 4294901760
        %v1041 = vsub.f32 %v241, %v1040
        %1042 = vmatpush1.msra.mxu0 %v1041
        %1043 = vmatprep.subr.mxu0 0.0
        %v1044 = vand.u32 %v242, 4294901760
        %v1045 = vsub.f32 %v242, %v1044
        %1046 = vmatpush1.msra.mxu0 %v1045
        %1047 = vmatprep.subr.mxu0 0.0
        %1048 = vmatpush1.msra.mxu0 0.0
        %1049 = vmatprep.subr.mxu0 0.0
        %1050 = vmatpush1.msra.mxu0 0.0
        %1051 = vmatprep.subr.mxu0 0.0
        %1052 = vmatpush1.msra.mxu0 0.0
        %1053 = vmatprep.subr.mxu0 0.0
        %1054 = vmatpush1.msra.mxu0 0.0
        %1055 = vmatprep.subr.mxu0 0.0
        %1056 = vmatpush1.msra.mxu0 0.0
        %1057 = vmatprep.subr.mxu0 0.0
        %1058 = vmatpush1.msra.mxu0 0.0
        %1059 = vmatprep.subr.mxu0 0.0
        %1060 = vmatpush1.msra.mxu0 0.0
        %1061 = vmatprep.subr.mxu0 0.0
        %1062 = vmatpush1.msra.mxu0 0.0
        %1063 = vmatprep.subr.mxu0 0.0
        %1064 = vmatpush1.msra.mxu0 0.0
        %1065 = vmatprep.subr.mxu0 0.0
        %1066 = vmatpush1.msra.mxu0 0.0
        %1067 = vmatprep.subr.mxu0 0.0
        %1068 = vmatpush1.msra.mxu0 0.0
        %1069 = vmatprep.subr.mxu0 0.0
        %1070 = vmatpush1.msra.mxu0 0.0
        %1071 = vmatprep.subr.mxu0 0.0
        %1072 = vmatpush1.msra.mxu0 0.0
        %1073 = vmatprep.subr.mxu0 0.0
        %1074 = vmatpush1.msra.mxu0 0.0
        %1075 = vmatprep.subr.mxu0 0.0
        %1076 = vmatpush1.msra.mxu0 0.0
        %1077 = vmatprep.subr.mxu0 0.0
        %1078 = vmatpush1.msra.mxu0 0.0
        %1079 = vmatprep.mubr.f32.mxu0 0.0
        %v1080 = vand.u32 %v195, 4294901760
        %v1081 = vsub.f32 %v195, %v1080
        %1082 = vmatmul.mubr.f32.gmra.mrb[0].mxu0 %v1081
        %v1083 = vpop.f32.mrb[0].mxu0
        %v1084 = vadd.f32 %v794, %v1083
        %v1085 = vpop.f32.mrb[0].mxu0
        %1086 = vmatprep.mubr.f32.mxu0 0.0
        %v1087 = vand.u32 %v196, 4294901760
        %v1088 = vsub.f32 %v196, %v1087
        %1089 = vmatmul.mubr.f32.gmra.mrb[0].mxu0 %v1088
        %v1090 = vpop.f32.mrb[0].mxu0
        %v1091 = vadd.f32 %v800, %v1090
        %v1092 = vpop.f32.mrb[0].mxu0
        %1093 = vmatprep.mubr.f32.mxu0 0.0
        %v1094 = vand.u32 %v197, 4294901760
        %v1095 = vsub.f32 %v197, %v1094
        %1096 = vmatmul.mubr.f32.gmra.mrb[0].mxu0 %v1095
        %v1097 = vpop.f32.mrb[0].mxu0
        %v1098 = vadd.f32 %v806, %v1097
        %v1099 = vpop.f32.mrb[0].mxu0
        %1100 = vmatprep.mubr.f32.mxu0 0.0
        %v1101 = vand.u32 %v198, 4294901760
        %v1102 = vsub.f32 %v198, %v1101
        %1103 = vmatmul.mubr.f32.gmra.mrb[0].mxu0 %v1102
        %v1104 = vpop.f32.mrb[0].mxu0
        %v1105 = vadd.f32 %v812, %v1104
        %v1106 = vpop.f32.mrb[0].mxu0
        %1107 = vmatprep.mubr.f32.mxu0 0.0
        %v1108 = vand.u32 %v199, 4294901760
        %v1109 = vsub.f32 %v199, %v1108
        %1110 = vmatmul.mubr.f32.gmra.mrb[0].mxu0 %v1109
        %v1111 = vpop.f32.mrb[0].mxu0
        %v1112 = vadd.f32 %v818, %v1111
        %v1113 = vpop.f32.mrb[0].mxu0
        %1114 = vmatprep.mubr.f32.mxu0 0.0
        %v1115 = vand.u32 %v200, 4294901760
        %v1116 = vsub.f32 %v200, %v1115
        %1117 = vmatmul.mubr.f32.gmra.mrb[0].mxu0 %v1116
        %v1118 = vpop.f32.mrb[0].mxu0
        %v1119 = vadd.f32 %v824, %v1118
        %v1120 = vpop.f32.mrb[0].mxu0
        %1121 = vmatprep.mubr.f32.mxu0 0.0
        %v1122 = vand.u32 %v201, 4294901760
        %v1123 = vsub.f32 %v201, %v1122
        %1124 = vmatmul.mubr.f32.gmra.mrb[0].mxu0 %v1123
        %v1125 = vpop.f32.mrb[0].mxu0
        %v1126 = vadd.f32 %v830, %v1125
        %v1127 = vpop.f32.mrb[0].mxu0
        %1128 = vmatprep.mubr.f32.mxu0 0.0
        %v1129 = vand.u32 %v202, 4294901760
        %v1130 = vsub.f32 %v202, %v1129
        %1131 = vmatmul.mubr.f32.gmra.mrb[0].mxu0 %v1130
        %v1132 = vpop.f32.mrb[0].mxu0
        %v1133 = vadd.f32 %v836, %v1132
        %v1134 = vpop.f32.mrb[0].mxu0
        %1135 = vmatprep.mubr.f32.mxu0 0.0
        %v1136 = vand.u32 %v203, 4294901760
        %v1137 = vsub.f32 %v203, %v1136
        %1138 = vmatmul.mubr.f32.gmra.mrb[0].mxu0 %v1137
        %v1139 = vpop.f32.mrb[0].mxu0
        %v1140 = vadd.f32 %v842, %v1139
        %v1141 = vpop.f32.mrb[0].mxu0
        %1142 = vmatprep.mubr.f32.mxu0 0.0
        %v1143 = vand.u32 %v204, 4294901760
        %v1144 = vsub.f32 %v204, %v1143
        %1145 = vmatmul.mubr.f32.gmra.mrb[0].mxu0 %v1144
        %v1146 = vpop.f32.mrb[0].mxu0
        %v1147 = vadd.f32 %v848, %v1146
        %v1148 = vpop.f32.mrb[0].mxu0
        %1149 = vmatprep.mubr.f32.mxu0 0.0
        %v1150 = vand.u32 %v205, 4294901760
        %v1151 = vsub.f32 %v205, %v1150
        %1152 = vmatmul.mubr.f32.gmra.mrb[0].mxu0 %v1151
        %v1153 = vpop.f32.mrb[0].mxu0
        %v1154 = vadd.f32 %v854, %v1153
        %v1155 = vpop.f32.mrb[0].mxu0
        %1156 = vmatprep.mubr.f32.mxu0 0.0
        %v1157 = vand.u32 %v206, 4294901760
        %v1158 = vsub.f32 %v206, %v1157
        %1159 = vmatmul.mubr.f32.gmra.mrb[0].mxu0 %v1158
        %v1160 = vpop.f32.mrb[0].mxu0
        %v1161 = vadd.f32 %v860, %v1160
        %v1162 = vpop.f32.mrb[0].mxu0
        %1163 = vmatprep.mubr.f32.mxu0 0.0
        %v1164 = vand.u32 %v207, 4294901760
        %v1165 = vsub.f32 %v207, %v1164
        %1166 = vmatmul.mubr.f32.gmra.mrb[0].mxu0 %v1165
        %v1167 = vpop.f32.mrb[0].mxu0
        %v1168 = vadd.f32 %v866, %v1167
        %v1169 = vpop.f32.mrb[0].mxu0
        %1170 = vmatprep.mubr.f32.mxu0 0.0
        %v1171 = vand.u32 %v208, 4294901760
        %v1172 = vsub.f32 %v208, %v1171
        %1173 = vmatmul.mubr.f32.gmra.mrb[0].mxu0 %v1172
        %v1174 = vpop.f32.mrb[0].mxu0
        %v1175 = vadd.f32 %v872, %v1174
        %v1176 = vpop.f32.mrb[0].mxu0
        %1177 = vmatprep.mubr.f32.mxu0 0.0
        %v1178 = vand.u32 %v209, 4294901760
        %v1179 = vsub.f32 %v209, %v1178
        %1180 = vmatmul.mubr.f32.gmra.mrb[0].mxu0 %v1179
        %v1181 = vpop.f32.mrb[0].mxu0
        %v1182 = vadd.f32 %v878, %v1181
        %v1183 = vpop.f32.mrb[0].mxu0
        %1184 = vmatprep.mubr.f32.mxu0 0.0
        %v1185 = vand.u32 %v210, 4294901760
        %v1186 = vsub.f32 %v210, %v1185
        %1187 = vmatmul.mubr.f32.gmra.mrb[0].mxu0 %v1186
        %v1188 = vpop.f32.mrb[0].mxu0
        %v1189 = vadd.f32 %v884, %v1188
        %v1190 = vpop.f32.mrb[0].mxu0
        %1191 = vmatprep.mubr.f32.mxu0 0.0
        %v1192 = vand.u32 %v211, 4294901760
        %v1193 = vsub.f32 %v211, %v1192
        %1194 = vmatmul.mubr.f32.gmra.mrb[0].mxu0 %v1193
        %v1195 = vpop.f32.mrb[0].mxu0
        %v1196 = vadd.f32 %v890, %v1195
        %v1197 = vpop.f32.mrb[0].mxu0
        %1198 = vmatprep.mubr.f32.mxu0 0.0
        %v1199 = vand.u32 %v212, 4294901760
        %v1200 = vsub.f32 %v212, %v1199
        %1201 = vmatmul.mubr.f32.gmra.mrb[0].mxu0 %v1200
        %v1202 = vpop.f32.mrb[0].mxu0
        %v1203 = vadd.f32 %v896, %v1202
        %v1204 = vpop.f32.mrb[0].mxu0
        %1205 = vmatprep.mubr.f32.mxu0 0.0
        %v1206 = vand.u32 %v213, 4294901760
        %v1207 = vsub.f32 %v213, %v1206
        %1208 = vmatmul.mubr.f32.gmra.mrb[0].mxu0 %v1207
        %v1209 = vpop.f32.mrb[0].mxu0
        %v1210 = vadd.f32 %v902, %v1209
        %v1211 = vpop.f32.mrb[0].mxu0
        %1212 = vmatprep.mubr.f32.mxu0 0.0
        %v1213 = vand.u32 %v214, 4294901760
        %v1214 = vsub.f32 %v214, %v1213
        %1215 = vmatmul.mubr.f32.gmra.mrb[0].mxu0 %v1214
        %v1216 = vpop.f32.mrb[0].mxu0
        %v1217 = vadd.f32 %v908, %v1216
        %v1218 = vpop.f32.mrb[0].mxu0
        %1219 = vmatprep.mubr.f32.mxu0 0.0
        %v1220 = vand.u32 %v215, 4294901760
        %v1221 = vsub.f32 %v215, %v1220
        %1222 = vmatmul.mubr.f32.gmra.mrb[0].mxu0 %v1221
        %v1223 = vpop.f32.mrb[0].mxu0
        %v1224 = vadd.f32 %v914, %v1223
        %v1225 = vpop.f32.mrb[0].mxu0
        %1226 = vmatprep.mubr.f32.mxu0 0.0
        %v1227 = vand.u32 %v216, 4294901760
        %v1228 = vsub.f32 %v216, %v1227
        %1229 = vmatmul.mubr.f32.gmra.mrb[0].mxu0 %v1228
        %v1230 = vpop.f32.mrb[0].mxu0
        %v1231 = vadd.f32 %v920, %v1230
        %v1232 = vpop.f32.mrb[0].mxu0
        %1233 = vmatprep.mubr.f32.mxu0 0.0
        %v1234 = vand.u32 %v217, 4294901760
        %v1235 = vsub.f32 %v217, %v1234
        %1236 = vmatmul.mubr.f32.gmra.mrb[0].mxu0 %v1235
        %v1237 = vpop.f32.mrb[0].mxu0
        %v1238 = vadd.f32 %v926, %v1237
        %v1239 = vpop.f32.mrb[0].mxu0
        %1240 = vmatprep.mubr.f32.mxu0 0.0
        %v1241 = vand.u32 %v218, 4294901760
        %v1242 = vsub.f32 %v218, %v1241
        %1243 = vmatmul.mubr.f32.gmra.mrb[0].mxu0 %v1242
        %v1244 = vpop.f32.mrb[0].mxu0
        %v1245 = vadd.f32 %v932, %v1244
        %v1246 = vpop.f32.mrb[0].mxu0
        %1247 = vmatprep.mubr.f32.mxu0 0.0
        %v1248 = vand.u32 %v219, 4294901760
        %v1249 = vsub.f32 %v219, %v1248
        %1250 = vmatmul.mubr.f32.gmra.mrb[0].mxu0 %v1249
        %v1251 = vpop.f32.mrb[0].mxu0
        %v1252 = vadd.f32 %v938, %v1251
        %v1253 = vpop.f32.mrb[0].mxu0
        %1254 = vmatprep.mubr.f32.mxu0 0.0
        %v1255 = vand.u32 %v220, 4294901760
        %v1256 = vsub.f32 %v220, %v1255
        %1257 = vmatmul.mubr.f32.gmra.mrb[0].mxu0 %v1256
        %v1258 = vpop.f32.mrb[0].mxu0
        %v1259 = vadd.f32 %v944, %v1258
        %v1260 = vpop.f32.mrb[0].mxu0
        %1261 = vmatprep.mubr.f32.mxu0 0.0
        %v1262 = vand.u32 %v221, 4294901760
        %v1263 = vsub.f32 %v221, %v1262
        %1264 = vmatmul.mubr.f32.gmra.mrb[0].mxu0 %v1263
        %v1265 = vpop.f32.mrb[0].mxu0
        %v1266 = vadd.f32 %v950, %v1265
        %v1267 = vpop.f32.mrb[0].mxu0
        %1268 = vmatprep.mubr.f32.mxu0 0.0
        %v1269 = vand.u32 %v222, 4294901760
        %v1270 = vsub.f32 %v222, %v1269
        %1271 = vmatmul.mubr.f32.gmra.mrb[0].mxu0 %v1270
        %v1272 = vpop.f32.mrb[0].mxu0
        %v1273 = vadd.f32 %v956, %v1272
        %v1274 = vpop.f32.mrb[0].mxu0
        %1275 = vmatprep.mubr.f32.mxu0 0.0
        %v1276 = vand.u32 %v223, 4294901760
        %v1277 = vsub.f32 %v223, %v1276
        %1278 = vmatmul.mubr.f32.gmra.mrb[0].mxu0 %v1277
        %v1279 = vpop.f32.mrb[0].mxu0
        %v1280 = vadd.f32 %v962, %v1279
        %v1281 = vpop.f32.mrb[0].mxu0
        %1282 = vmatprep.mubr.f32.mxu0 0.0
        %v1283 = vand.u32 %v224, 4294901760
        %v1284 = vsub.f32 %v224, %v1283
        %1285 = vmatmul.mubr.f32.gmra.mrb[0].mxu0 %v1284
        %v1286 = vpop.f32.mrb[0].mxu0
        %v1287 = vadd.f32 %v968, %v1286
        %v1288 = vpop.f32.mrb[0].mxu0
        %1289 = vmatprep.mubr.f32.mxu0 0.0
        %v1290 = vand.u32 %v225, 4294901760
        %v1291 = vsub.f32 %v225, %v1290
        %1292 = vmatmul.mubr.f32.gmra.mrb[0].mxu0 %v1291
        %v1293 = vpop.f32.mrb[0].mxu0
        %v1294 = vadd.f32 %v974, %v1293
        %v1295 = vpop.f32.mrb[0].mxu0
        %1296 = vmatprep.mubr.f32.mxu0 0.0
        %v1297 = vand.u32 %v226, 4294901760
        %v1298 = vsub.f32 %v226, %v1297
        %1299 = vmatmul.mubr.f32.gmra.mrb[0].mxu0 %v1298
        %v1300 = vpop.f32.mrb[0].mxu0
        %v1301 = vadd.f32 %v980, %v1300
        %v1302 = vpop.f32.mrb[0].mxu0
        %1303 = vdwg.mxu0
        %1304 = vmatprep.subr.mxu0 0.0
        %v1305 = vand.u32 %v227, 4294901760
        %1306 = vmatpush1.msra.mxu0 %v1305
        %1307 = vmatprep.subr.mxu0 0.0
        %v1308 = vand.u32 %v228, 4294901760
        %1309 = vmatpush1.msra.mxu0 %v1308
        %1310 = vmatprep.subr.mxu0 0.0
        %v1311 = vand.u32 %v229, 4294901760
        %1312 = vmatpush1.msra.mxu0 %v1311
        %1313 = vmatprep.subr.mxu0 0.0
        %v1314 = vand.u32 %v230, 4294901760
        %1315 = vmatpush1.msra.mxu0 %v1314
        %1316 = vmatprep.subr.mxu0 0.0
        %v1317 = vand.u32 %v231, 4294901760
        %1318 = vmatpush1.msra.mxu0 %v1317
        %1319 = vmatprep.subr.mxu0 0.0
        %v1320 = vand.u32 %v232, 4294901760
        %1321 = vmatpush1.msra.mxu0 %v1320
        %1322 = vmatprep.subr.mxu0 0.0
        %v1323 = vand.u32 %v233, 4294901760
        %1324 = vmatpush1.msra.mxu0 %v1323
        %1325 = vmatprep.subr.mxu0 0.0
        %v1326 = vand.u32 %v234, 4294901760
        %1327 = vmatpush1.msra.mxu0 %v1326
        %1328 = vmatprep.subr.mxu0 0.0
        %v1329 = vand.u32 %v235, 4294901760
        %1330 = vmatpush1.msra.mxu0 %v1329
        %1331 = vmatprep.subr.mxu0 0.0
        %v1332 = vand.u32 %v236, 4294901760
        %1333 = vmatpush1.msra.mxu0 %v1332
        %1334 = vmatprep.subr.mxu0 0.0
        %v1335 = vand.u32 %v237, 4294901760
        %1336 = vmatpush1.msra.mxu0 %v1335
        %1337 = vmatprep.subr.mxu0 0.0
        %v1338 = vand.u32 %v238, 4294901760
        %1339 = vmatpush1.msra.mxu0 %v1338
        %1340 = vmatprep.subr.mxu0 0.0
        %v1341 = vand.u32 %v239, 4294901760
        %1342 = vmatpush1.msra.mxu0 %v1341
        %1343 = vmatprep.subr.mxu0 0.0
        %v1344 = vand.u32 %v240, 4294901760
        %1345 = vmatpush1.msra.mxu0 %v1344
        %1346 = vmatprep.subr.mxu0 0.0
        %v1347 = vand.u32 %v241, 4294901760
        %1348 = vmatpush1.msra.mxu0 %v1347
        %1349 = vmatprep.subr.mxu0 0.0
        %v1350 = vand.u32 %v242, 4294901760
        %1351 = vmatpush1.msra.mxu0 %v1350
        %1352 = vmatprep.subr.mxu0 0.0
        %1353 = vmatpush1.msra.mxu0 0.0
        %1354 = vmatprep.subr.mxu0 0.0
        %1355 = vmatpush1.msra.mxu0 0.0
        %1356 = vmatprep.subr.mxu0 0.0
        %1357 = vmatpush1.msra.mxu0 0.0
        %1358 = vmatprep.subr.mxu0 0.0
        %1359 = vmatpush1.msra.mxu0 0.0
        %1360 = vmatprep.subr.mxu0 0.0
        %1361 = vmatpush1.msra.mxu0 0.0
        %1362 = vmatprep.subr.mxu0 0.0
        %1363 = vmatpush1.msra.mxu0 0.0
        %1364 = vmatprep.subr.mxu0 0.0
        %1365 = vmatpush1.msra.mxu0 0.0
        %1366 = vmatprep.subr.mxu0 0.0
        %1367 = vmatpush1.msra.mxu0 0.0
        %1368 = vmatprep.subr.mxu0 0.0
        %1369 = vmatpush1.msra.mxu0 0.0
        %1370 = vmatprep.subr.mxu0 0.0
        %1371 = vmatpush1.msra.mxu0 0.0
        %1372 = vmatprep.subr.mxu0 0.0
        %1373 = vmatpush1.msra.mxu0 0.0
        %1374 = vmatprep.subr.mxu0 0.0
        %1375 = vmatpush1.msra.mxu0 0.0
        %1376 = vmatprep.subr.mxu0 0.0
        %1377 = vmatpush1.msra.mxu0 0.0
        %1378 = vmatprep.subr.mxu0 0.0
        %1379 = vmatpush1.msra.mxu0 0.0
        %1380 = vmatprep.subr.mxu0 0.0
        %1381 = vmatpush1.msra.mxu0 0.0
        %1382 = vmatprep.subr.mxu0 0.0
        %1383 = vmatpush1.msra.mxu0 0.0
        %1384 = vmatprep.mubr.f32.mxu0 0.0
        %v1385 = vand.u32 %v195, 4294901760
        %v1386 = vsub.f32 %v195, %v1385
        %v1387 = vand.u32 %v1386, 4294901760
        %1388 = vmatmul.mubr.f32.gmra.mrb[0].mxu0 %v1387
        %v1389 = vpop.f32.mrb[0].mxu0
        %v1390 = vadd.f32 %v1084, %v1389
        %v1391 = vpop.f32.mrb[0].mxu0
        %1392 = vmatprep.mubr.f32.mxu0 0.0
        %v1393 = vand.u32 %v196, 4294901760
        %v1394 = vsub.f32 %v196, %v1393
        %v1395 = vand.u32 %v1394, 4294901760
        %1396 = vmatmul.mubr.f32.gmra.mrb[0].mxu0 %v1395
        %v1397 = vpop.f32.mrb[0].mxu0
        %v1398 = vadd.f32 %v1091, %v1397
        %v1399 = vpop.f32.mrb[0].mxu0
        %1400 = vmatprep.mubr.f32.mxu0 0.0
        %v1401 = vand.u32 %v197, 4294901760
        %v1402 = vsub.f32 %v197, %v1401
        %v1403 = vand.u32 %v1402, 4294901760
        %1404 = vmatmul.mubr.f32.gmra.mrb[0].mxu0 %v1403
        %v1405 = vpop.f32.mrb[0].mxu0
        %v1406 = vadd.f32 %v1098, %v1405
        %v1407 = vpop.f32.mrb[0].mxu0
        %1408 = vmatprep.mubr.f32.mxu0 0.0
        %v1409 = vand.u32 %v198, 4294901760
        %v1410 = vsub.f32 %v198, %v1409
        %v1411 = vand.u32 %v1410, 4294901760
        %1412 = vmatmul.mubr.f32.gmra.mrb[0].mxu0 %v1411
        %v1413 = vpop.f32.mrb[0].mxu0
        %v1414 = vadd.f32 %v1105, %v1413
        %v1415 = vpop.f32.mrb[0].mxu0
        %1416 = vmatprep.mubr.f32.mxu0 0.0
        %v1417 = vand.u32 %v199, 4294901760
        %v1418 = vsub.f32 %v199, %v1417
        %v1419 = vand.u32 %v1418, 4294901760
        %1420 = vmatmul.mubr.f32.gmra.mrb[0].mxu0 %v1419
        %v1421 = vpop.f32.mrb[0].mxu0
        %v1422 = vadd.f32 %v1112, %v1421
        %v1423 = vpop.f32.mrb[0].mxu0
        %1424 = vmatprep.mubr.f32.mxu0 0.0
        %v1425 = vand.u32 %v200, 4294901760
        %v1426 = vsub.f32 %v200, %v1425
        %v1427 = vand.u32 %v1426, 4294901760
        %1428 = vmatmul.mubr.f32.gmra.mrb[0].mxu0 %v1427
        %v1429 = vpop.f32.mrb[0].mxu0
        %v1430 = vadd.f32 %v1119, %v1429
        %v1431 = vpop.f32.mrb[0].mxu0
        %1432 = vmatprep.mubr.f32.mxu0 0.0
        %v1433 = vand.u32 %v201, 4294901760
        %v1434 = vsub.f32 %v201, %v1433
        %v1435 = vand.u32 %v1434, 4294901760
        %1436 = vmatmul.mubr.f32.gmra.mrb[0].mxu0 %v1435
        %v1437 = vpop.f32.mrb[0].mxu0
        %v1438 = vadd.f32 %v1126, %v1437
        %v1439 = vpop.f32.mrb[0].mxu0
        %1440 = vmatprep.mubr.f32.mxu0 0.0
        %v1441 = vand.u32 %v202, 4294901760
        %v1442 = vsub.f32 %v202, %v1441
        %v1443 = vand.u32 %v1442, 4294901760
        %1444 = vmatmul.mubr.f32.gmra.mrb[0].mxu0 %v1443
        %v1445 = vpop.f32.mrb[0].mxu0
        %v1446 = vadd.f32 %v1133, %v1445
        %v1447 = vpop.f32.mrb[0].mxu0
        %1448 = vmatprep.mubr.f32.mxu0 0.0
        %v1449 = vand.u32 %v203, 4294901760
        %v1450 = vsub.f32 %v203, %v1449
        %v1451 = vand.u32 %v1450, 4294901760
        %1452 = vmatmul.mubr.f32.gmra.mrb[0].mxu0 %v1451
        %v1453 = vpop.f32.mrb[0].mxu0
        %v1454 = vadd.f32 %v1140, %v1453
        %v1455 = vpop.f32.mrb[0].mxu0
        %1456 = vmatprep.mubr.f32.mxu0 0.0
        %v1457 = vand.u32 %v204, 4294901760
        %v1458 = vsub.f32 %v204, %v1457
        %v1459 = vand.u32 %v1458, 4294901760
        %1460 = vmatmul.mubr.f32.gmra.mrb[0].mxu0 %v1459
        %v1461 = vpop.f32.mrb[0].mxu0
        %v1462 = vadd.f32 %v1147, %v1461
        %v1463 = vpop.f32.mrb[0].mxu0
        %1464 = vmatprep.mubr.f32.mxu0 0.0
        %v1465 = vand.u32 %v205, 4294901760
        %v1466 = vsub.f32 %v205, %v1465
        %v1467 = vand.u32 %v1466, 4294901760
        %1468 = vmatmul.mubr.f32.gmra.mrb[0].mxu0 %v1467
        %v1469 = vpop.f32.mrb[0].mxu0
        %v1470 = vadd.f32 %v1154, %v1469
        %v1471 = vpop.f32.mrb[0].mxu0
        %1472 = vmatprep.mubr.f32.mxu0 0.0
        %v1473 = vand.u32 %v206, 4294901760
        %v1474 = vsub.f32 %v206, %v1473
        %v1475 = vand.u32 %v1474, 4294901760
        %1476 = vmatmul.mubr.f32.gmra.mrb[0].mxu0 %v1475
        %v1477 = vpop.f32.mrb[0].mxu0
        %v1478 = vadd.f32 %v1161, %v1477
        %v1479 = vpop.f32.mrb[0].mxu0
        %1480 = vmatprep.mubr.f32.mxu0 0.0
        %v1481 = vand.u32 %v207, 4294901760
        %v1482 = vsub.f32 %v207, %v1481
        %v1483 = vand.u32 %v1482, 4294901760
        %1484 = vmatmul.mubr.f32.gmra.mrb[0].mxu0 %v1483
        %v1485 = vpop.f32.mrb[0].mxu0
        %v1486 = vadd.f32 %v1168, %v1485
        %v1487 = vpop.f32.mrb[0].mxu0
        %1488 = vmatprep.mubr.f32.mxu0 0.0
        %v1489 = vand.u32 %v208, 4294901760
        %v1490 = vsub.f32 %v208, %v1489
        %v1491 = vand.u32 %v1490, 4294901760
        %1492 = vmatmul.mubr.f32.gmra.mrb[0].mxu0 %v1491
        %v1493 = vpop.f32.mrb[0].mxu0
        %v1494 = vadd.f32 %v1175, %v1493
        %v1495 = vpop.f32.mrb[0].mxu0
        %1496 = vmatprep.mubr.f32.mxu0 0.0
        %v1497 = vand.u32 %v209, 4294901760
        %v1498 = vsub.f32 %v209, %v1497
        %v1499 = vand.u32 %v1498, 4294901760
        %1500 = vmatmul.mubr.f32.gmra.mrb[0].mxu0 %v1499
        %v1501 = vpop.f32.mrb[0].mxu0
        %v1502 = vadd.f32 %v1182, %v1501
        %v1503 = vpop.f32.mrb[0].mxu0
        %1504 = vmatprep.mubr.f32.mxu0 0.0
        %v1505 = vand.u32 %v210, 4294901760
        %v1506 = vsub.f32 %v210, %v1505
        %v1507 = vand.u32 %v1506, 4294901760
        %1508 = vmatmul.mubr.f32.gmra.mrb[0].mxu0 %v1507
        %v1509 = vpop.f32.mrb[0].mxu0
        %v1510 = vadd.f32 %v1189, %v1509
        %v1511 = vpop.f32.mrb[0].mxu0
        %1512 = vmatprep.mubr.f32.mxu0 0.0
        %v1513 = vand.u32 %v211, 4294901760
        %v1514 = vsub.f32 %v211, %v1513
        %v1515 = vand.u32 %v1514, 4294901760
        %1516 = vmatmul.mubr.f32.gmra.mrb[0].mxu0 %v1515
        %v1517 = vpop.f32.mrb[0].mxu0
        %v1518 = vadd.f32 %v1196, %v1517
        %v1519 = vpop.f32.mrb[0].mxu0
        %1520 = vmatprep.mubr.f32.mxu0 0.0
        %v1521 = vand.u32 %v212, 4294901760
        %v1522 = vsub.f32 %v212, %v1521
        %v1523 = vand.u32 %v1522, 4294901760
        %1524 = vmatmul.mubr.f32.gmra.mrb[0].mxu0 %v1523
        %v1525 = vpop.f32.mrb[0].mxu0
        %v1526 = vadd.f32 %v1203, %v1525
        %v1527 = vpop.f32.mrb[0].mxu0
        %1528 = vmatprep.mubr.f32.mxu0 0.0
        %v1529 = vand.u32 %v213, 4294901760
        %v1530 = vsub.f32 %v213, %v1529
        %v1531 = vand.u32 %v1530, 4294901760
        %1532 = vmatmul.mubr.f32.gmra.mrb[0].mxu0 %v1531
        %v1533 = vpop.f32.mrb[0].mxu0
        %v1534 = vadd.f32 %v1210, %v1533
        %v1535 = vpop.f32.mrb[0].mxu0
        %1536 = vmatprep.mubr.f32.mxu0 0.0
        %v1537 = vand.u32 %v214, 4294901760
        %v1538 = vsub.f32 %v214, %v1537
        %v1539 = vand.u32 %v1538, 4294901760
        %1540 = vmatmul.mubr.f32.gmra.mrb[0].mxu0 %v1539
        %v1541 = vpop.f32.mrb[0].mxu0
        %v1542 = vadd.f32 %v1217, %v1541
        %v1543 = vpop.f32.mrb[0].mxu0
        %1544 = vmatprep.mubr.f32.mxu0 0.0
        %v1545 = vand.u32 %v215, 4294901760
        %v1546 = vsub.f32 %v215, %v1545
        %v1547 = vand.u32 %v1546, 4294901760
        %1548 = vmatmul.mubr.f32.gmra.mrb[0].mxu0 %v1547
        %v1549 = vpop.f32.mrb[0].mxu0
        %v1550 = vadd.f32 %v1224, %v1549
        %v1551 = vpop.f32.mrb[0].mxu0
        %1552 = vmatprep.mubr.f32.mxu0 0.0
        %v1553 = vand.u32 %v216, 4294901760
        %v1554 = vsub.f32 %v216, %v1553
        %v1555 = vand.u32 %v1554, 4294901760
        %1556 = vmatmul.mubr.f32.gmra.mrb[0].mxu0 %v1555
        %v1557 = vpop.f32.mrb[0].mxu0
        %v1558 = vadd.f32 %v1231, %v1557
        %v1559 = vpop.f32.mrb[0].mxu0
        %1560 = vmatprep.mubr.f32.mxu0 0.0
        %v1561 = vand.u32 %v217, 4294901760
        %v1562 = vsub.f32 %v217, %v1561
        %v1563 = vand.u32 %v1562, 4294901760
        %1564 = vmatmul.mubr.f32.gmra.mrb[0].mxu0 %v1563
        %v1565 = vpop.f32.mrb[0].mxu0
        %v1566 = vadd.f32 %v1238, %v1565
        %v1567 = vpop.f32.mrb[0].mxu0
        %1568 = vmatprep.mubr.f32.mxu0 0.0
        %v1569 = vand.u32 %v218, 4294901760
        %v1570 = vsub.f32 %v218, %v1569
        %v1571 = vand.u32 %v1570, 4294901760
        %1572 = vmatmul.mubr.f32.gmra.mrb[0].mxu0 %v1571
        %v1573 = vpop.f32.mrb[0].mxu0
        %v1574 = vadd.f32 %v1245, %v1573
        %v1575 = vpop.f32.mrb[0].mxu0
        %1576 = vmatprep.mubr.f32.mxu0 0.0
        %v1577 = vand.u32 %v219, 4294901760
        %v1578 = vsub.f32 %v219, %v1577
        %v1579 = vand.u32 %v1578, 4294901760
        %1580 = vmatmul.mubr.f32.gmra.mrb[0].mxu0 %v1579
        %v1581 = vpop.f32.mrb[0].mxu0
        %v1582 = vadd.f32 %v1252, %v1581
        %v1583 = vpop.f32.mrb[0].mxu0
        %1584 = vmatprep.mubr.f32.mxu0 0.0
        %v1585 = vand.u32 %v220, 4294901760
        %v1586 = vsub.f32 %v220, %v1585
        %v1587 = vand.u32 %v1586, 4294901760
        %1588 = vmatmul.mubr.f32.gmra.mrb[0].mxu0 %v1587
        %v1589 = vpop.f32.mrb[0].mxu0
        %v1590 = vadd.f32 %v1259, %v1589
        %v1591 = vpop.f32.mrb[0].mxu0
        %1592 = vmatprep.mubr.f32.mxu0 0.0
        %v1593 = vand.u32 %v221, 4294901760
        %v1594 = vsub.f32 %v221, %v1593
        %v1595 = vand.u32 %v1594, 4294901760
        %1596 = vmatmul.mubr.f32.gmra.mrb[0].mxu0 %v1595
        %v1597 = vpop.f32.mrb[0].mxu0
        %v1598 = vadd.f32 %v1266, %v1597
        %v1599 = vpop.f32.mrb[0].mxu0
        %1600 = vmatprep.mubr.f32.mxu0 0.0
        %v1601 = vand.u32 %v222, 4294901760
        %v1602 = vsub.f32 %v222, %v1601
        %v1603 = vand.u32 %v1602, 4294901760
        %1604 = vmatmul.mubr.f32.gmra.mrb[0].mxu0 %v1603
        %v1605 = vpop.f32.mrb[0].mxu0
        %v1606 = vadd.f32 %v1273, %v1605
        %v1607 = vpop.f32.mrb[0].mxu0
        %1608 = vmatprep.mubr.f32.mxu0 0.0
        %v1609 = vand.u32 %v223, 4294901760
        %v1610 = vsub.f32 %v223, %v1609
        %v1611 = vand.u32 %v1610, 4294901760
        %1612 = vmatmul.mubr.f32.gmra.mrb[0].mxu0 %v1611
        %v1613 = vpop.f32.mrb[0].mxu0
        %v1614 = vadd.f32 %v1280, %v1613
        %v1615 = vpop.f32.mrb[0].mxu0
        %1616 = vmatprep.mubr.f32.mxu0 0.0
        %v1617 = vand.u32 %v224, 4294901760
        %v1618 = vsub.f32 %v224, %v1617
        %v1619 = vand.u32 %v1618, 4294901760
        %1620 = vmatmul.mubr.f32.gmra.mrb[0].mxu0 %v1619
        %v1621 = vpop.f32.mrb[0].mxu0
        %v1622 = vadd.f32 %v1287, %v1621
        %v1623 = vpop.f32.mrb[0].mxu0
        %1624 = vmatprep.mubr.f32.mxu0 0.0
        %v1625 = vand.u32 %v225, 4294901760
        %v1626 = vsub.f32 %v225, %v1625
        %v1627 = vand.u32 %v1626, 4294901760
        %1628 = vmatmul.mubr.f32.gmra.mrb[0].mxu0 %v1627
        %v1629 = vpop.f32.mrb[0].mxu0
        %v1630 = vadd.f32 %v1294, %v1629
        %v1631 = vpop.f32.mrb[0].mxu0
        %1632 = vmatprep.mubr.f32.mxu0 0.0
        %v1633 = vand.u32 %v226, 4294901760
        %v1634 = vsub.f32 %v226, %v1633
        %v1635 = vand.u32 %v1634, 4294901760
        %1636 = vmatmul.mubr.f32.gmra.mrb[0].mxu0 %v1635
        %v1637 = vpop.f32.mrb[0].mxu0
        %v1638 = vadd.f32 %v1301, %v1637
        %v1639 = vpop.f32.mrb[0].mxu0
        %1640 = vdwg.mxu0
        %1641 = vmatprep.subr.mxu0 0.0
        %v1642 = vand.u32 %v227, 4294901760
        %v1643 = vsub.f32 %v227, %v1642
        %v1644 = vand.u32 %v1643, 4294901760
        %1645 = vmatpush1.msra.mxu0 %v1644
        %1646 = vmatprep.subr.mxu0 0.0
        %v1647 = vand.u32 %v228, 4294901760
        %v1648 = vsub.f32 %v228, %v1647
        %v1649 = vand.u32 %v1648, 4294901760
        %1650 = vmatpush1.msra.mxu0 %v1649
        %1651 = vmatprep.subr.mxu0 0.0
        %v1652 = vand.u32 %v229, 4294901760
        %v1653 = vsub.f32 %v229, %v1652
        %v1654 = vand.u32 %v1653, 4294901760
        %1655 = vmatpush1.msra.mxu0 %v1654
        %1656 = vmatprep.subr.mxu0 0.0
        %v1657 = vand.u32 %v230, 4294901760
        %v1658 = vsub.f32 %v230, %v1657
        %v1659 = vand.u32 %v1658, 4294901760
        %1660 = vmatpush1.msra.mxu0 %v1659
        %1661 = vmatprep.subr.mxu0 0.0
        %v1662 = vand.u32 %v231, 4294901760
        %v1663 = vsub.f32 %v231, %v1662
        %v1664 = vand.u32 %v1663, 4294901760
        %1665 = vmatpush1.msra.mxu0 %v1664
        %1666 = vmatprep.subr.mxu0 0.0
        %v1667 = vand.u32 %v232, 4294901760
        %v1668 = vsub.f32 %v232, %v1667
        %v1669 = vand.u32 %v1668, 4294901760
        %1670 = vmatpush1.msra.mxu0 %v1669
        %1671 = vmatprep.subr.mxu0 0.0
        %v1672 = vand.u32 %v233, 4294901760
        %v1673 = vsub.f32 %v233, %v1672
        %v1674 = vand.u32 %v1673, 4294901760
        %1675 = vmatpush1.msra.mxu0 %v1674
        %1676 = vmatprep.subr.mxu0 0.0
        %v1677 = vand.u32 %v234, 4294901760
        %v1678 = vsub.f32 %v234, %v1677
        %v1679 = vand.u32 %v1678, 4294901760
        %1680 = vmatpush1.msra.mxu0 %v1679
        %1681 = vmatprep.subr.mxu0 0.0
        %v1682 = vand.u32 %v235, 4294901760
        %v1683 = vsub.f32 %v235, %v1682
        %v1684 = vand.u32 %v1683, 4294901760
        %1685 = vmatpush1.msra.mxu0 %v1684
        %1686 = vmatprep.subr.mxu0 0.0
        %v1687 = vand.u32 %v236, 4294901760
        %v1688 = vsub.f32 %v236, %v1687
        %v1689 = vand.u32 %v1688, 4294901760
        %1690 = vmatpush1.msra.mxu0 %v1689
        %1691 = vmatprep.subr.mxu0 0.0
        %v1692 = vand.u32 %v237, 4294901760
        %v1693 = vsub.f32 %v237, %v1692
        %v1694 = vand.u32 %v1693, 4294901760
        %1695 = vmatpush1.msra.mxu0 %v1694
        %1696 = vmatprep.subr.mxu0 0.0
        %v1697 = vand.u32 %v238, 4294901760
        %v1698 = vsub.f32 %v238, %v1697
        %v1699 = vand.u32 %v1698, 4294901760
        %1700 = vmatpush1.msra.mxu0 %v1699
        %1701 = vmatprep.subr.mxu0 0.0
        %v1702 = vand.u32 %v239, 4294901760
        %v1703 = vsub.f32 %v239, %v1702
        %v1704 = vand.u32 %v1703, 4294901760
        %1705 = vmatpush1.msra.mxu0 %v1704
        %1706 = vmatprep.subr.mxu0 0.0
        %v1707 = vand.u32 %v240, 4294901760
        %v1708 = vsub.f32 %v240, %v1707
        %v1709 = vand.u32 %v1708, 4294901760
        %1710 = vmatpush1.msra.mxu0 %v1709
        %1711 = vmatprep.subr.mxu0 0.0
        %v1712 = vand.u32 %v241, 4294901760
        %v1713 = vsub.f32 %v241, %v1712
        %v1714 = vand.u32 %v1713, 4294901760
        %1715 = vmatpush1.msra.mxu0 %v1714
        %1716 = vmatprep.subr.mxu0 0.0
        %v1717 = vand.u32 %v242, 4294901760
        %v1718 = vsub.f32 %v242, %v1717
        %v1719 = vand.u32 %v1718, 4294901760
        %1720 = vmatpush1.msra.mxu0 %v1719
        %1721 = vmatprep.subr.mxu0 0.0
        %1722 = vmatpush1.msra.mxu0 0.0
        %1723 = vmatprep.subr.mxu0 0.0
        %1724 = vmatpush1.msra.mxu0 0.0
        %1725 = vmatprep.subr.mxu0 0.0
        %1726 = vmatpush1.msra.mxu0 0.0
        %1727 = vmatprep.subr.mxu0 0.0
        %1728 = vmatpush1.msra.mxu0 0.0
        %1729 = vmatprep.subr.mxu0 0.0
        %1730 = vmatpush1.msra.mxu0 0.0
        %1731 = vmatprep.subr.mxu0 0.0
        %1732 = vmatpush1.msra.mxu0 0.0
        %1733 = vmatprep.subr.mxu0 0.0
        %1734 = vmatpush1.msra.mxu0 0.0
        %1735 = vmatprep.subr.mxu0 0.0
        %1736 = vmatpush1.msra.mxu0 0.0
        %1737 = vmatprep.subr.mxu0 0.0
        %1738 = vmatpush1.msra.mxu0 0.0
        %1739 = vmatprep.subr.mxu0 0.0
        %1740 = vmatpush1.msra.mxu0 0.0
        %1741 = vmatprep.subr.mxu0 0.0
        %1742 = vmatpush1.msra.mxu0 0.0
        %1743 = vmatprep.subr.mxu0 0.0
        %1744 = vmatpush1.msra.mxu0 0.0
        %1745 = vmatprep.subr.mxu0 0.0
        %1746 = vmatpush1.msra.mxu0 0.0
        %1747 = vmatprep.subr.mxu0 0.0
        %1748 = vmatpush1.msra.mxu0 0.0
        %1749 = vmatprep.subr.mxu0 0.0
        %1750 = vmatpush1.msra.mxu0 0.0
        %1751 = vmatprep.subr.mxu0 0.0
        %1752 = vmatpush1.msra.mxu0 0.0
        %1753 = vmatprep.mubr.f32.mxu0 0.0
        %v1754 = vand.u32 %v195, 4294901760
        %1755 = vmatmul.mubr.f32.gmra.mrb[0].mxu0 %v1754
        %v1756 = vpop.f32.mrb[0].mxu0
        %v1757 = vadd.f32 %v1390, %v1756
        %v1758 = vpop.f32.mrb[0].mxu0
        %1759 = vmatprep.mubr.f32.mxu0 0.0
        %v1760 = vand.u32 %v196, 4294901760
        %1761 = vmatmul.mubr.f32.gmra.mrb[0].mxu0 %v1760
        %v1762 = vpop.f32.mrb[0].mxu0
        %v1763 = vadd.f32 %v1398, %v1762
        %v1764 = vpop.f32.mrb[0].mxu0
        %1765 = vmatprep.mubr.f32.mxu0 0.0
        %v1766 = vand.u32 %v197, 4294901760
        %1767 = vmatmul.mubr.f32.gmra.mrb[0].mxu0 %v1766
        %v1768 = vpop.f32.mrb[0].mxu0
        %v1769 = vadd.f32 %v1406, %v1768
        %v1770 = vpop.f32.mrb[0].mxu0
        %1771 = vmatprep.mubr.f32.mxu0 0.0
        %v1772 = vand.u32 %v198, 4294901760
        %1773 = vmatmul.mubr.f32.gmra.mrb[0].mxu0 %v1772
        %v1774 = vpop.f32.mrb[0].mxu0
        %v1775 = vadd.f32 %v1414, %v1774
        %v1776 = vpop.f32.mrb[0].mxu0
        %1777 = vmatprep.mubr.f32.mxu0 0.0
        %v1778 = vand.u32 %v199, 4294901760
        %1779 = vmatmul.mubr.f32.gmra.mrb[0].mxu0 %v1778
        %v1780 = vpop.f32.mrb[0].mxu0
        %v1781 = vadd.f32 %v1422, %v1780
        %v1782 = vpop.f32.mrb[0].mxu0
        %1783 = vmatprep.mubr.f32.mxu0 0.0
        %v1784 = vand.u32 %v200, 4294901760
        %1785 = vmatmul.mubr.f32.gmra.mrb[0].mxu0 %v1784
        %v1786 = vpop.f32.mrb[0].mxu0
        %v1787 = vadd.f32 %v1430, %v1786
        %v1788 = vpop.f32.mrb[0].mxu0
        %1789 = vmatprep.mubr.f32.mxu0 0.0
        %v1790 = vand.u32 %v201, 4294901760
        %1791 = vmatmul.mubr.f32.gmra.mrb[0].mxu0 %v1790
        %v1792 = vpop.f32.mrb[0].mxu0
        %v1793 = vadd.f32 %v1438, %v1792
        %v1794 = vpop.f32.mrb[0].mxu0
        %1795 = vmatprep.mubr.f32.mxu0 0.0
        %v1796 = vand.u32 %v202, 4294901760
        %1797 = vmatmul.mubr.f32.gmra.mrb[0].mxu0 %v1796
        %v1798 = vpop.f32.mrb[0].mxu0
        %v1799 = vadd.f32 %v1446, %v1798
        %v1800 = vpop.f32.mrb[0].mxu0
        %1801 = vmatprep.mubr.f32.mxu0 0.0
        %v1802 = vand.u32 %v203, 4294901760
        %1803 = vmatmul.mubr.f32.gmra.mrb[0].mxu0 %v1802
        %v1804 = vpop.f32.mrb[0].mxu0
        %v1805 = vadd.f32 %v1454, %v1804
        %v1806 = vpop.f32.mrb[0].mxu0
        %1807 = vmatprep.mubr.f32.mxu0 0.0
        %v1808 = vand.u32 %v204, 4294901760
        %1809 = vmatmul.mubr.f32.gmra.mrb[0].mxu0 %v1808
        %v1810 = vpop.f32.mrb[0].mxu0
        %v1811 = vadd.f32 %v1462, %v1810
        %v1812 = vpop.f32.mrb[0].mxu0
        %1813 = vmatprep.mubr.f32.mxu0 0.0
        %v1814 = vand.u32 %v205, 4294901760
        %1815 = vmatmul.mubr.f32.gmra.mrb[0].mxu0 %v1814
        %v1816 = vpop.f32.mrb[0].mxu0
        %v1817 = vadd.f32 %v1470, %v1816
        %v1818 = vpop.f32.mrb[0].mxu0
        %1819 = vmatprep.mubr.f32.mxu0 0.0
        %v1820 = vand.u32 %v206, 4294901760
        %1821 = vmatmul.mubr.f32.gmra.mrb[0].mxu0 %v1820
        %v1822 = vpop.f32.mrb[0].mxu0
        %v1823 = vadd.f32 %v1478, %v1822
        %v1824 = vpop.f32.mrb[0].mxu0
        %1825 = vmatprep.mubr.f32.mxu0 0.0
        %v1826 = vand.u32 %v207, 4294901760
        %1827 = vmatmul.mubr.f32.gmra.mrb[0].mxu0 %v1826
        %v1828 = vpop.f32.mrb[0].mxu0
        %v1829 = vadd.f32 %v1486, %v1828
        %v1830 = vpop.f32.mrb[0].mxu0
        %1831 = vmatprep.mubr.f32.mxu0 0.0
        %v1832 = vand.u32 %v208, 4294901760
        %1833 = vmatmul.mubr.f32.gmra.mrb[0].mxu0 %v1832
        %v1834 = vpop.f32.mrb[0].mxu0
        %v1835 = vadd.f32 %v1494, %v1834
        %v1836 = vpop.f32.mrb[0].mxu0
        %1837 = vmatprep.mubr.f32.mxu0 0.0
        %v1838 = vand.u32 %v209, 4294901760
        %1839 = vmatmul.mubr.f32.gmra.mrb[0].mxu0 %v1838
        %v1840 = vpop.f32.mrb[0].mxu0
        %v1841 = vadd.f32 %v1502, %v1840
        %v1842 = vpop.f32.mrb[0].mxu0
        %1843 = vmatprep.mubr.f32.mxu0 0.0
        %v1844 = vand.u32 %v210, 4294901760
        %1845 = vmatmul.mubr.f32.gmra.mrb[0].mxu0 %v1844
        %v1846 = vpop.f32.mrb[0].mxu0
        %v1847 = vadd.f32 %v1510, %v1846
        %v1848 = vpop.f32.mrb[0].mxu0
        %1849 = vmatprep.mubr.f32.mxu0 0.0
        %v1850 = vand.u32 %v211, 4294901760
        %1851 = vmatmul.mubr.f32.gmra.mrb[0].mxu0 %v1850
        %v1852 = vpop.f32.mrb[0].mxu0
        %v1853 = vadd.f32 %v1518, %v1852
        %v1854 = vpop.f32.mrb[0].mxu0
        %1855 = vmatprep.mubr.f32.mxu0 0.0
        %v1856 = vand.u32 %v212, 4294901760
        %1857 = vmatmul.mubr.f32.gmra.mrb[0].mxu0 %v1856
        %v1858 = vpop.f32.mrb[0].mxu0
        %v1859 = vadd.f32 %v1526, %v1858
        %v1860 = vpop.f32.mrb[0].mxu0
        %1861 = vmatprep.mubr.f32.mxu0 0.0
        %v1862 = vand.u32 %v213, 4294901760
        %1863 = vmatmul.mubr.f32.gmra.mrb[0].mxu0 %v1862
        %v1864 = vpop.f32.mrb[0].mxu0
        %v1865 = vadd.f32 %v1534, %v1864
        %v1866 = vpop.f32.mrb[0].mxu0
        %1867 = vmatprep.mubr.f32.mxu0 0.0
        %v1868 = vand.u32 %v214, 4294901760
        %1869 = vmatmul.mubr.f32.gmra.mrb[0].mxu0 %v1868
        %v1870 = vpop.f32.mrb[0].mxu0
        %v1871 = vadd.f32 %v1542, %v1870
        %v1872 = vpop.f32.mrb[0].mxu0
        %1873 = vmatprep.mubr.f32.mxu0 0.0
        %v1874 = vand.u32 %v215, 4294901760
        %1875 = vmatmul.mubr.f32.gmra.mrb[0].mxu0 %v1874
        %v1876 = vpop.f32.mrb[0].mxu0
        %v1877 = vadd.f32 %v1550, %v1876
        %v1878 = vpop.f32.mrb[0].mxu0
        %1879 = vmatprep.mubr.f32.mxu0 0.0
        %v1880 = vand.u32 %v216, 4294901760
        %1881 = vmatmul.mubr.f32.gmra.mrb[0].mxu0 %v1880
        %v1882 = vpop.f32.mrb[0].mxu0
        %v1883 = vadd.f32 %v1558, %v1882
        %v1884 = vpop.f32.mrb[0].mxu0
        %1885 = vmatprep.mubr.f32.mxu0 0.0
        %v1886 = vand.u32 %v217, 4294901760
        %1887 = vmatmul.mubr.f32.gmra.mrb[0].mxu0 %v1886
        %v1888 = vpop.f32.mrb[0].mxu0
        %v1889 = vadd.f32 %v1566, %v1888
        %v1890 = vpop.f32.mrb[0].mxu0
        %1891 = vmatprep.mubr.f32.mxu0 0.0
        %v1892 = vand.u32 %v218, 4294901760
        %1893 = vmatmul.mubr.f32.gmra.mrb[0].mxu0 %v1892
        %v1894 = vpop.f32.mrb[0].mxu0
        %v1895 = vadd.f32 %v1574, %v1894
        %v1896 = vpop.f32.mrb[0].mxu0
        %1897 = vmatprep.mubr.f32.mxu0 0.0
        %v1898 = vand.u32 %v219, 4294901760
        %1899 = vmatmul.mubr.f32.gmra.mrb[0].mxu0 %v1898
        %v1900 = vpop.f32.mrb[0].mxu0
        %v1901 = vadd.f32 %v1582, %v1900
        %v1902 = vpop.f32.mrb[0].mxu0
        %1903 = vmatprep.mubr.f32.mxu0 0.0
        %v1904 = vand.u32 %v220, 4294901760
        %1905 = vmatmul.mubr.f32.gmra.mrb[0].mxu0 %v1904
        %v1906 = vpop.f32.mrb[0].mxu0
        %v1907 = vadd.f32 %v1590, %v1906
        %v1908 = vpop.f32.mrb[0].mxu0
        %1909 = vmatprep.mubr.f32.mxu0 0.0
        %v1910 = vand.u32 %v221, 4294901760
        %1911 = vmatmul.mubr.f32.gmra.mrb[0].mxu0 %v1910
        %v1912 = vpop.f32.mrb[0].mxu0
        %v1913 = vadd.f32 %v1598, %v1912
        %v1914 = vpop.f32.mrb[0].mxu0
        %1915 = vmatprep.mubr.f32.mxu0 0.0
        %v1916 = vand.u32 %v222, 4294901760
        %1917 = vmatmul.mubr.f32.gmra.mrb[0].mxu0 %v1916
        %v1918 = vpop.f32.mrb[0].mxu0
        %v1919 = vadd.f32 %v1606, %v1918
        %v1920 = vpop.f32.mrb[0].mxu0
        %1921 = vmatprep.mubr.f32.mxu0 0.0
        %v1922 = vand.u32 %v223, 4294901760
        %1923 = vmatmul.mubr.f32.gmra.mrb[0].mxu0 %v1922
        %v1924 = vpop.f32.mrb[0].mxu0
        %v1925 = vadd.f32 %v1614, %v1924
        %v1926 = vpop.f32.mrb[0].mxu0
        %1927 = vmatprep.mubr.f32.mxu0 0.0
        %v1928 = vand.u32 %v224, 4294901760
        %1929 = vmatmul.mubr.f32.gmra.mrb[0].mxu0 %v1928
        %v1930 = vpop.f32.mrb[0].mxu0
        %v1931 = vadd.f32 %v1622, %v1930
        %v1932 = vpop.f32.mrb[0].mxu0
        %1933 = vmatprep.mubr.f32.mxu0 0.0
        %v1934 = vand.u32 %v225, 4294901760
        %1935 = vmatmul.mubr.f32.gmra.mrb[0].mxu0 %v1934
        %v1936 = vpop.f32.mrb[0].mxu0
        %v1937 = vadd.f32 %v1630, %v1936
        %v1938 = vpop.f32.mrb[0].mxu0
        %1939 = vmatprep.mubr.f32.mxu0 0.0
        %v1940 = vand.u32 %v226, 4294901760
        %1941 = vmatmul.mubr.f32.gmra.mrb[0].mxu0 %v1940
        %v1942 = vpop.f32.mrb[0].mxu0
        %v1943 = vadd.f32 %v1638, %v1942
        %v1944 = vpop.f32.mrb[0].mxu0
        %1945 = vdwg.mxu0
        %1946 = vmatprep.subr.mxu0 0.0
        %v1947 = vand.u32 %v227, 4294901760
        %1948 = vmatpush1.msra.mxu0 %v1947
        %1949 = vmatprep.subr.mxu0 0.0
        %v1950 = vand.u32 %v228, 4294901760
        %1951 = vmatpush1.msra.mxu0 %v1950
        %1952 = vmatprep.subr.mxu0 0.0
        %v1953 = vand.u32 %v229, 4294901760
        %1954 = vmatpush1.msra.mxu0 %v1953
        %1955 = vmatprep.subr.mxu0 0.0
        %v1956 = vand.u32 %v230, 4294901760
        %1957 = vmatpush1.msra.mxu0 %v1956
        %1958 = vmatprep.subr.mxu0 0.0
        %v1959 = vand.u32 %v231, 4294901760
        %1960 = vmatpush1.msra.mxu0 %v1959
        %1961 = vmatprep.subr.mxu0 0.0
        %v1962 = vand.u32 %v232, 4294901760
        %1963 = vmatpush1.msra.mxu0 %v1962
        %1964 = vmatprep.subr.mxu0 0.0
        %v1965 = vand.u32 %v233, 4294901760
        %1966 = vmatpush1.msra.mxu0 %v1965
        %1967 = vmatprep.subr.mxu0 0.0
        %v1968 = vand.u32 %v234, 4294901760
        %1969 = vmatpush1.msra.mxu0 %v1968
        %1970 = vmatprep.subr.mxu0 0.0
        %v1971 = vand.u32 %v235, 4294901760
        %1972 = vmatpush1.msra.mxu0 %v1971
        %1973 = vmatprep.subr.mxu0 0.0
        %v1974 = vand.u32 %v236, 4294901760
        %1975 = vmatpush1.msra.mxu0 %v1974
        %1976 = vmatprep.subr.mxu0 0.0
        %v1977 = vand.u32 %v237, 4294901760
        %1978 = vmatpush1.msra.mxu0 %v1977
        %1979 = vmatprep.subr.mxu0 0.0
        %v1980 = vand.u32 %v238, 4294901760
        %1981 = vmatpush1.msra.mxu0 %v1980
        %1982 = vmatprep.subr.mxu0 0.0
        %v1983 = vand.u32 %v239, 4294901760
        %1984 = vmatpush1.msra.mxu0 %v1983
        %1985 = vmatprep.subr.mxu0 0.0
        %v1986 = vand.u32 %v240, 4294901760
        %1987 = vmatpush1.msra.mxu0 %v1986
        %1988 = vmatprep.subr.mxu0 0.0
        %v1989 = vand.u32 %v241, 4294901760
        %1990 = vmatpush1.msra.mxu0 %v1989
        %1991 = vmatprep.subr.mxu0 0.0
        %v1992 = vand.u32 %v242, 4294901760
        %1993 = vmatpush1.msra.mxu0 %v1992
        %1994 = vmatprep.subr.mxu0 0.0
        %1995 = vmatpush1.msra.mxu0 0.0
        %1996 = vmatprep.subr.mxu0 0.0
        %1997 = vmatpush1.msra.mxu0 0.0
        %1998 = vmatprep.subr.mxu0 0.0
        %1999 = vmatpush1.msra.mxu0 0.0
        %2000 = vmatprep.subr.mxu0 0.0
        %2001 = vmatpush1.msra.mxu0 0.0
        %2002 = vmatprep.subr.mxu0 0.0
        %2003 = vmatpush1.msra.mxu0 0.0
        %2004 = vmatprep.subr.mxu0 0.0
        %2005 = vmatpush1.msra.mxu0 0.0
        %2006 = vmatprep.subr.mxu0 0.0
        %2007 = vmatpush1.msra.mxu0 0.0
        %2008 = vmatprep.subr.mxu0 0.0
        %2009 = vmatpush1.msra.mxu0 0.0
        %2010 = vmatprep.subr.mxu0 0.0
        %2011 = vmatpush1.msra.mxu0 0.0
        %2012 = vmatprep.subr.mxu0 0.0
        %2013 = vmatpush1.msra.mxu0 0.0
        %2014 = vmatprep.subr.mxu0 0.0
        %2015 = vmatpush1.msra.mxu0 0.0
        %2016 = vmatprep.subr.mxu0 0.0
        %2017 = vmatpush1.msra.mxu0 0.0
        %2018 = vmatprep.subr.mxu0 0.0
        %2019 = vmatpush1.msra.mxu0 0.0
        %2020 = vmatprep.subr.mxu0 0.0
        %2021 = vmatpush1.msra.mxu0 0.0
        %2022 = vmatprep.subr.mxu0 0.0
        %2023 = vmatpush1.msra.mxu0 0.0
        %2024 = vmatprep.subr.mxu0 0.0
        %2025 = vmatpush1.msra.mxu0 0.0
        %2026 = vmatprep.mubr.f32.mxu0 0.0
        %v2027 = vand.u32 %v195, 4294901760
        %2028 = vmatmul.mubr.f32.gmra.mrb[0].mxu0 %v2027
        %v2029 = vpop.f32.mrb[0].mxu0
        %v2030 = vadd.f32 %v1757, %v2029
        %v2031 = vpop.f32.mrb[0].mxu0
        %2032 = vmatprep.mubr.f32.mxu0 0.0
        %v2033 = vand.u32 %v196, 4294901760
        %2034 = vmatmul.mubr.f32.gmra.mrb[0].mxu0 %v2033
        %v2035 = vpop.f32.mrb[0].mxu0
        %v2036 = vadd.f32 %v1763, %v2035
        %v2037 = vpop.f32.mrb[0].mxu0
        %2038 = vmatprep.mubr.f32.mxu0 0.0
        %v2039 = vand.u32 %v197, 4294901760
        %2040 = vmatmul.mubr.f32.gmra.mrb[0].mxu0 %v2039
        %v2041 = vpop.f32.mrb[0].mxu0
        %v2042 = vadd.f32 %v1769, %v2041
        %v2043 = vpop.f32.mrb[0].mxu0
        %2044 = vmatprep.mubr.f32.mxu0 0.0
        %v2045 = vand.u32 %v198, 4294901760
        %2046 = vmatmul.mubr.f32.gmra.mrb[0].mxu0 %v2045
        %v2047 = vpop.f32.mrb[0].mxu0
        %v2048 = vadd.f32 %v1775, %v2047
        %v2049 = vpop.f32.mrb[0].mxu0
        %2050 = vmatprep.mubr.f32.mxu0 0.0
        %v2051 = vand.u32 %v199, 4294901760
        %2052 = vmatmul.mubr.f32.gmra.mrb[0].mxu0 %v2051
        %v2053 = vpop.f32.mrb[0].mxu0
        %v2054 = vadd.f32 %v1781, %v2053
        %v2055 = vpop.f32.mrb[0].mxu0
        %2056 = vmatprep.mubr.f32.mxu0 0.0
        %v2057 = vand.u32 %v200, 4294901760
        %2058 = vmatmul.mubr.f32.gmra.mrb[0].mxu0 %v2057
        %v2059 = vpop.f32.mrb[0].mxu0
        %v2060 = vadd.f32 %v1787, %v2059
        %v2061 = vpop.f32.mrb[0].mxu0
        %2062 = vmatprep.mubr.f32.mxu0 0.0
        %v2063 = vand.u32 %v201, 4294901760
        %2064 = vmatmul.mubr.f32.gmra.mrb[0].mxu0 %v2063
        %v2065 = vpop.f32.mrb[0].mxu0
        %v2066 = vadd.f32 %v1793, %v2065
        %v2067 = vpop.f32.mrb[0].mxu0
        %2068 = vmatprep.mubr.f32.mxu0 0.0
        %v2069 = vand.u32 %v202, 4294901760
        %2070 = vmatmul.mubr.f32.gmra.mrb[0].mxu0 %v2069
        %v2071 = vpop.f32.mrb[0].mxu0
        %v2072 = vadd.f32 %v1799, %v2071
        %v2073 = vpop.f32.mrb[0].mxu0
        %2074 = vmatprep.mubr.f32.mxu0 0.0
        %v2075 = vand.u32 %v203, 4294901760
        %2076 = vmatmul.mubr.f32.gmra.mrb[0].mxu0 %v2075
        %v2077 = vpop.f32.mrb[0].mxu0
        %v2078 = vadd.f32 %v1805, %v2077
        %v2079 = vpop.f32.mrb[0].mxu0
        %2080 = vmatprep.mubr.f32.mxu0 0.0
        %v2081 = vand.u32 %v204, 4294901760
        %2082 = vmatmul.mubr.f32.gmra.mrb[0].mxu0 %v2081
        %v2083 = vpop.f32.mrb[0].mxu0
        %v2084 = vadd.f32 %v1811, %v2083
        %v2085 = vpop.f32.mrb[0].mxu0
        %2086 = vmatprep.mubr.f32.mxu0 0.0
        %v2087 = vand.u32 %v205, 4294901760
        %2088 = vmatmul.mubr.f32.gmra.mrb[0].mxu0 %v2087
        %v2089 = vpop.f32.mrb[0].mxu0
        %v2090 = vadd.f32 %v1817, %v2089
        %v2091 = vpop.f32.mrb[0].mxu0
        %2092 = vmatprep.mubr.f32.mxu0 0.0
        %v2093 = vand.u32 %v206, 4294901760
        %2094 = vmatmul.mubr.f32.gmra.mrb[0].mxu0 %v2093
        %v2095 = vpop.f32.mrb[0].mxu0
        %v2096 = vadd.f32 %v1823, %v2095
        %v2097 = vpop.f32.mrb[0].mxu0
        %2098 = vmatprep.mubr.f32.mxu0 0.0
        %v2099 = vand.u32 %v207, 4294901760
        %2100 = vmatmul.mubr.f32.gmra.mrb[0].mxu0 %v2099
        %v2101 = vpop.f32.mrb[0].mxu0
        %v2102 = vadd.f32 %v1829, %v2101
        %v2103 = vpop.f32.mrb[0].mxu0
        %2104 = vmatprep.mubr.f32.mxu0 0.0
        %v2105 = vand.u32 %v208, 4294901760
        %2106 = vmatmul.mubr.f32.gmra.mrb[0].mxu0 %v2105
        %v2107 = vpop.f32.mrb[0].mxu0
        %v2108 = vadd.f32 %v1835, %v2107
        %v2109 = vpop.f32.mrb[0].mxu0
        %2110 = vmatprep.mubr.f32.mxu0 0.0
        %v2111 = vand.u32 %v209, 4294901760
        %2112 = vmatmul.mubr.f32.gmra.mrb[0].mxu0 %v2111
        %v2113 = vpop.f32.mrb[0].mxu0
        %v2114 = vadd.f32 %v1841, %v2113
        %v2115 = vpop.f32.mrb[0].mxu0
        %2116 = vmatprep.mubr.f32.mxu0 0.0
        %v2117 = vand.u32 %v210, 4294901760
        %2118 = vmatmul.mubr.f32.gmra.mrb[0].mxu0 %v2117
        %v2119 = vpop.f32.mrb[0].mxu0
        %v2120 = vadd.f32 %v1847, %v2119
        %v2121 = vpop.f32.mrb[0].mxu0
        %2122 = vmatprep.mubr.f32.mxu0 0.0
        %v2123 = vand.u32 %v211, 4294901760
        %2124 = vmatmul.mubr.f32.gmra.mrb[0].mxu0 %v2123
        %v2125 = vpop.f32.mrb[0].mxu0
        %v2126 = vadd.f32 %v1853, %v2125
        %v2127 = vpop.f32.mrb[0].mxu0
        %2128 = vmatprep.mubr.f32.mxu0 0.0
        %v2129 = vand.u32 %v212, 4294901760
        %2130 = vmatmul.mubr.f32.gmra.mrb[0].mxu0 %v2129
        %v2131 = vpop.f32.mrb[0].mxu0
        %v2132 = vadd.f32 %v1859, %v2131
        %v2133 = vpop.f32.mrb[0].mxu0
        %2134 = vmatprep.mubr.f32.mxu0 0.0
        %v2135 = vand.u32 %v213, 4294901760
        %2136 = vmatmul.mubr.f32.gmra.mrb[0].mxu0 %v2135
        %v2137 = vpop.f32.mrb[0].mxu0
        %v2138 = vadd.f32 %v1865, %v2137
        %v2139 = vpop.f32.mrb[0].mxu0
        %2140 = vmatprep.mubr.f32.mxu0 0.0
        %v2141 = vand.u32 %v214, 4294901760
        %2142 = vmatmul.mubr.f32.gmra.mrb[0].mxu0 %v2141
        %v2143 = vpop.f32.mrb[0].mxu0
        %v2144 = vadd.f32 %v1871, %v2143
        %v2145 = vpop.f32.mrb[0].mxu0
        %2146 = vmatprep.mubr.f32.mxu0 0.0
        %v2147 = vand.u32 %v215, 4294901760
        %2148 = vmatmul.mubr.f32.gmra.mrb[0].mxu0 %v2147
        %v2149 = vpop.f32.mrb[0].mxu0
        %v2150 = vadd.f32 %v1877, %v2149
        %v2151 = vpop.f32.mrb[0].mxu0
        %2152 = vmatprep.mubr.f32.mxu0 0.0
        %v2153 = vand.u32 %v216, 4294901760
        %2154 = vmatmul.mubr.f32.gmra.mrb[0].mxu0 %v2153
        %v2155 = vpop.f32.mrb[0].mxu0
        %v2156 = vadd.f32 %v1883, %v2155
        %v2157 = vpop.f32.mrb[0].mxu0
        %2158 = vmatprep.mubr.f32.mxu0 0.0
        %v2159 = vand.u32 %v217, 4294901760
        %2160 = vmatmul.mubr.f32.gmra.mrb[0].mxu0 %v2159
        %v2161 = vpop.f32.mrb[0].mxu0
        %v2162 = vadd.f32 %v1889, %v2161
        %v2163 = vpop.f32.mrb[0].mxu0
        %2164 = vmatprep.mubr.f32.mxu0 0.0
        %v2165 = vand.u32 %v218, 4294901760
        %2166 = vmatmul.mubr.f32.gmra.mrb[0].mxu0 %v2165
        %v2167 = vpop.f32.mrb[0].mxu0
        %v2168 = vadd.f32 %v1895, %v2167
        %v2169 = vpop.f32.mrb[0].mxu0
        %2170 = vmatprep.mubr.f32.mxu0 0.0
        %v2171 = vand.u32 %v219, 4294901760
        %2172 = vmatmul.mubr.f32.gmra.mrb[0].mxu0 %v2171
        %v2173 = vpop.f32.mrb[0].mxu0
        %v2174 = vadd.f32 %v1901, %v2173
        %v2175 = vpop.f32.mrb[0].mxu0
        %2176 = vmatprep.mubr.f32.mxu0 0.0
        %v2177 = vand.u32 %v220, 4294901760
        %2178 = vmatmul.mubr.f32.gmra.mrb[0].mxu0 %v2177
        %v2179 = vpop.f32.mrb[0].mxu0
        %v2180 = vadd.f32 %v1907, %v2179
        %v2181 = vpop.f32.mrb[0].mxu0
        %2182 = vmatprep.mubr.f32.mxu0 0.0
        %v2183 = vand.u32 %v221, 4294901760
        %2184 = vmatmul.mubr.f32.gmra.mrb[0].mxu0 %v2183
        %v2185 = vpop.f32.mrb[0].mxu0
        %v2186 = vadd.f32 %v1913, %v2185
        %v2187 = vpop.f32.mrb[0].mxu0
        %2188 = vmatprep.mubr.f32.mxu0 0.0
        %v2189 = vand.u32 %v222, 4294901760
        %2190 = vmatmul.mubr.f32.gmra.mrb[0].mxu0 %v2189
        %v2191 = vpop.f32.mrb[0].mxu0
        %v2192 = vadd.f32 %v1919, %v2191
        %v2193 = vpop.f32.mrb[0].mxu0
        %2194 = vmatprep.mubr.f32.mxu0 0.0
        %v2195 = vand.u32 %v223, 4294901760
        %2196 = vmatmul.mubr.f32.gmra.mrb[0].mxu0 %v2195
        %v2197 = vpop.f32.mrb[0].mxu0
        %v2198 = vadd.f32 %v1925, %v2197
        %v2199 = vpop.f32.mrb[0].mxu0
        %2200 = vmatprep.mubr.f32.mxu0 0.0
        %v2201 = vand.u32 %v224, 4294901760
        %2202 = vmatmul.mubr.f32.gmra.mrb[0].mxu0 %v2201
        %v2203 = vpop.f32.mrb[0].mxu0
        %v2204 = vadd.f32 %v1931, %v2203
        %v2205 = vpop.f32.mrb[0].mxu0
        %2206 = vmatprep.mubr.f32.mxu0 0.0
        %v2207 = vand.u32 %v225, 4294901760
        %2208 = vmatmul.mubr.f32.gmra.mrb[0].mxu0 %v2207
        %v2209 = vpop.f32.mrb[0].mxu0
        %v2210 = vadd.f32 %v1937, %v2209
        %v2211 = vpop.f32.mrb[0].mxu0
        %2212 = vmatprep.mubr.f32.mxu0 0.0
        %v2213 = vand.u32 %v226, 4294901760
        %2214 = vmatmul.mubr.f32.gmra.mrb[0].mxu0 %v2213
        %v2215 = vpop.f32.mrb[0].mxu0
        %v2216 = vadd.f32 %v1943, %v2215
        %v2217 = vpop.f32.mrb[0].mxu0
        %2218 = vdwg.mxu0
        %vm2219 = vcmask 7168
        %2220 = vst.msk [vmem:[%s193] sm:$0xff] %vm2219, %v2030
        %2221 = vst.msk [vmem:[%s193 + $0x8] sm:$0xff] %vm2219, %v2036
        %2222 = vst.msk [vmem:[%s193 + $0x10] sm:$0xff] %vm2219, %v2042
        %2223 = vst.msk [vmem:[%s193 + $0x18] sm:$0xff] %vm2219, %v2048
        %2224 = vst.msk [vmem:[%s193 + $0x20] sm:$0xff] %vm2219, %v2054
        %2225 = vst.msk [vmem:[%s193 + $0x28] sm:$0xff] %vm2219, %v2060
        %2226 = vst.msk [vmem:[%s193 + $0x30] sm:$0xff] %vm2219, %v2066
        %2227 = vst.msk [vmem:[%s193 + $0x38] sm:$0xff] %vm2219, %v2072
        %2228 = vst.msk [vmem:[%s193 + $0x40] sm:$0xff] %vm2219, %v2078
        %2229 = vst.msk [vmem:[%s193 + $0x48] sm:$0xff] %vm2219, %v2084
        %2230 = vst.msk [vmem:[%s193 + $0x50] sm:$0xff] %vm2219, %v2090
        %2231 = vst.msk [vmem:[%s193 + $0x58] sm:$0xff] %vm2219, %v2096
        %2232 = vst.msk [vmem:[%s193 + $0x60] sm:$0xff] %vm2219, %v2102
        %2233 = vst.msk [vmem:[%s193 + $0x68] sm:$0xff] %vm2219, %v2108
        %2234 = vst.msk [vmem:[%s193 + $0x70] sm:$0xff] %vm2219, %v2114
        %2235 = vst.msk [vmem:[%s193 + $0x78] sm:$0xff] %vm2219, %v2120
        %2236 = vst.msk [vmem:[%s193 + $0x80] sm:$0xff] %vm2219, %v2126
        %2237 = vst.msk [vmem:[%s193 + $0x88] sm:$0xff] %vm2219, %v2132
        %2238 = vst.msk [vmem:[%s193 + $0x90] sm:$0xff] %vm2219, %v2138
        %2239 = vst.msk [vmem:[%s193 + $0x98] sm:$0xff] %vm2219, %v2144
        %2240 = vst.msk [vmem:[%s193 + $0xa0] sm:$0xff] %vm2219, %v2150
        %2241 = vst.msk [vmem:[%s193 + $0xa8] sm:$0xff] %vm2219, %v2156
        %2242 = vst.msk [vmem:[%s193 + $0xb0] sm:$0xff] %vm2219, %v2162
        %2243 = vst.msk [vmem:[%s193 + $0xb8] sm:$0xff] %vm2219, %v2168
        %2244 = vst.msk [vmem:[%s193 + $0xc0] sm:$0xff] %vm2219, %v2174
        %2245 = vst.msk [vmem:[%s193 + $0xc8] sm:$0xff] %vm2219, %v2180
        %2246 = vst.msk [vmem:[%s193 + $0xd0] sm:$0xff] %vm2219, %v2186
        %2247 = vst.msk [vmem:[%s193 + $0xd8] sm:$0xff] %vm2219, %v2192
        %2248 = vst.msk [vmem:[%s193 + $0xe0] sm:$0xff] %vm2219, %v2198
        %2249 = vst.msk [vmem:[%s193 + $0xe8] sm:$0xff] %vm2219, %v2204
        %2250 = vst.msk [vmem:[%s193 + $0xf0] sm:$0xff] %vm2219, %v2210
        %2251 = vst.msk [vmem:[%s193 + $0xf8] sm:$0xff] %vm2219, %v2216
        %s2252 = smul.u32 32, %s18
        %p2253 = scmp.lt.s32.totalorder %s2252, 63
        %s2254 = scalar_select %p2253, %s2252, 63
        %s2255 = smul.addr %s2254, 8
        %s2256 = scalar_lea.vmem %s3, %s2255
        // Predicated region
        $region37: #{tpu_custom_call.1} parent=31 // pred_check
          %p2257 = pneg %p104
        $region38: #{tpu_custom_call.1} parent=31 // pred_check_branch
          %2259 = sbr.rel (%p2257) target = $region40
        $region39: #{tpu_custom_call.1} parent=31 // pred_region
          %s2260 = smul.u32 32, %s18
        $region40: #{tpu_custom_call.1} parent=31 // pred_fallthru
          _
      $region32: #{tpu_custom_call.1} parent=5 // pred_fallthru
        _
      %p2261 = scmp.le.s32.totalorder 2, %s13
      // Predicated region
      $region41: #{tpu_custom_call.1} parent=5 // pred_check
        %p2262 = pneg %p2261
      $region42: #{tpu_custom_call.1} parent=5 // pred_check_branch
        %2264 = sbr.rel (%p2262) target = $region44
      $region43: #{tpu_custom_call.1} parent=5 // pred_region
        %s2265 = ssub.s32 %s13, 2
        // Predicated region
        $region45: #{tpu_custom_call.1} parent=43 // pred_check
          %p2266 = pneg %p110
        $region46: #{tpu_custom_call.1} parent=43 // pred_check_branch
          %2268 = sbr.rel (%p2266) target = $region48
        $region47: #{tpu_custom_call.1} parent=43 // pred_region
          %s2269 = smul.u32 32, %s19
          %p2270 = scmp.lt.s32.totalorder %s2269, 63
          %s2271 = scalar_select %p2270, %s2269, 63
          %s2272 = smul.addr %s2271, 8
          %s2273 = scalar_lea.vmem %s3, %s2272
        $region48: #{tpu_custom_call.1} parent=43 // pred_fallthru
          _
      $region44: #{tpu_custom_call.1} parent=5 // pred_fallthru
        _
    $region6: #{tpu_custom_call.1} parent=1 // loop_footer
      %s17 = sadd.s32 1, %s13
    $region7: #{tpu_custom_call.1} parent=1 // loop_footer_branch
      %12 = sbr.rel target = $region3
    $region8: #{tpu_custom_call.1} parent=1 // loop_exit
      _
    %2274 = vsyncpa [#allocation4], 1
    %s2275 = scalar_lea.sflag [#allocation4], 1
    %2276 = vsyncpa %s2275, 1

</llo_original>
